<compile_context>
chip_gen: v5e
topology: v5e:2x2
jax: 0.10.0
libtpu: 0.0.40
codegen_flags: <defaults>
</compile_context>

<pallas_src>
import functools

import jax
import jax.numpy as jnp
from jax.experimental import pallas as pl
from jax.experimental.pallas import tpu as pltpu


def _round_up(x, m):
    return ((x + m - 1) // m) * m


def _softplus(x):
    # matches torch.nn.Softplus(beta=1, threshold=20)
    return jnp.where(x > 20.0, x, jnp.log1p(jnp.exp(jnp.minimum(x, 20.0))))


def _vmem_capacity_bytes():
    try:
        info = pltpu.get_tpu_info()
        cap = getattr(info, "vmem_capacity_bytes", None)
        if cap:
            return int(cap)
    except Exception:
        pass
    return 64 * 1024 * 1024  # conservative (v7x per-core VMEM)


def fused_gnn_kernel(x_hbm, gdiff_ref, gdstT_ref, w_ref, ntype_ref,
                     lw_ref, lb_ref, gamma_ref, beta_ref, res_ref,
                     fcw_ref, fcb_ref, out_ref,
                     h_f32, h_bf16, aggr, copy_sem,
                     *, num_node_types, hidden, f_pad, eps, resident):
    """Whole EnhancedGNNEncoder forward.  grid = (layer, edge_tile)."""
    layer = pl.program_id(0)
    et = pl.program_id(1)
    n_layers = pl.num_programs(0)
    n_etiles = pl.num_programs(1)

    # ---- one-time: DMA padded node features HBM -> f32 node-state scratch -----
    @pl.when(jnp.logical_and(layer == 0, et == 0))
    def _():
        cp = pltpu.make_async_copy(x_hbm, h_f32, copy_sem)
        cp.start()
        cp.wait()

    # ---- per-layer: refresh the bf16 mirror used as the MXU gather operand ----
    @pl.when(et == 0)
    def _():
        h_bf16[...] = h_f32[...].astype(jnp.bfloat16)

    # ---- edge tile: message + scatter-add --------------------------------------
    if resident:
        # whole operators live in VMEM (fetched once for all layers); slice a tile
        gdiff_t = gdiff_ref[et]          # [Et, Np] bf16
        gdstT_t = gdstT_ref[et]          # [Np, Et] bf16
    else:
        gdiff_t = gdiff_ref[...]
        gdstT_t = gdstT_ref[...]

    # x_src - x_dst for the tile: one bf16 MXU matmul (+-1/0 operand is exact)
    diff = jnp.dot(gdiff_t, h_bf16[...], preferred_element_type=jnp.float32)  # [Et, Fp]
    # per-edge softplus weight was precomputed in the wrapper (padded edges -> 0)
    msg = (w_ref[...] * diff).astype(jnp.bfloat16)                            # [Et, Fp]
    contrib = jnp.dot(gdstT_t, msg, preferred_element_type=jnp.float32)       # [Np, Fp]

    @pl.when(et == 0)
    def _():
        aggr[...] = contrib              # no zero-fill + read-add on the first tile

    @pl.when(et != 0)
    def _():
        aggr[...] += contrib

    # ---- layer epilogue (after the last edge tile of this layer) ---------------
    @pl.when(et == n_etiles - 1)
    def _():
        # all node-type Linears as one stacked bf16 MXU matmul, then one-hot select
        big = jnp.dot(aggr[...].astype(jnp.bfloat16), lw_ref[...],
                      preferred_element_type=jnp.float32) + lb_ref[...]       # [Np, Tn*Fp]
        ntype = ntype_ref[...]                                                # [Np, Tn]
        h = ntype[:, 0:1] * big[:, 0:f_pad]
        for t in range(1, num_node_types):
            h = h + ntype[:, t:t + 1] * big[:, t * f_pad:(t + 1) * f_pad]

        h = jnp.maximum(h, 0.0)          # relu; dropout(p=0.0) is a no-op

        # LayerNorm over the real `hidden` lanes; explicit mask so the
        # zero-padded-lane invariant is not load-bearing.
        lane = jax.lax.broadcasted_iota(jnp.int32, (1, f_pad), 1)
        feat_mask = (lane < hidden).astype(jnp.float32)
        h = h * feat_mask
        mu = jnp.sum(h, axis=-1, keepdims=True) * (1.0 / hidden)
        cen = (h - mu) * feat_mask
        var = jnp.sum(cen * cen, axis=-1, keepdims=True) * (1.0 / hidden)
        h = cen * jax.lax.rsqrt(var + eps)
        h = h * gamma_ref[...] + beta_ref[...]

        # residual (post-norm, as in the PyTorch module), gated per layer
        h = h + res_ref[...] * h_f32[...]
        h_f32[...] = h

    # ---- final projection (fc_out) at the very last grid step ------------------
    @pl.when(jnp.logical_and(layer == n_layers - 1, et == n_etiles - 1))
    def _():
        out_ref[...] = (jnp.dot(h_f32[...].astype(jnp.bfloat16), fcw_ref[...],
                                preferred_element_type=jnp.float32)
                        + fcb_ref[...])


class EnhancedGNNEncoderPallas:
    """JAX/Pallas re-implementation of EnhancedGNNEncoder (HydroConv branch)."""

    def __init__(self, in_channels, hidden_channels, out_channels, num_layers=2,
                 edge_dim=4, num_node_types=1, num_edge_types=1, residual=False,
                 key=jax.random.PRNGKey(42)):
        self.in_channels = in_channels
        self.hidden_channels = hidden_channels
        self.out_channels = out_channels
        self.num_layers = num_layers
        self.edge_dim = edge_dim
        self.num_node_types = num_node_types
        self.num_edge_types = num_edge_types
        self.residual = residual
        self.eps = 1e-5

        # lane-dense padded dims (multiples of 128 -> full MXU columns, unmasked vst)
        self.f_pad = _round_up(max(in_channels, hidden_channels), 128)
        self.o_pad = _round_up(out_channels, 128)

        # deterministic synthetic parameters (shapes mirror the nn.Module __init__)
        keys = jax.random.split(key, num_layers * 4 + 2)
        ki = iter(range(len(keys)))
        self.layers = []
        for l in range(num_layers):
            f_in = in_channels if l == 0 else hidden_channels
            lw = 0.1 * jax.random.normal(
                keys[next(ki)], (num_node_types, f_in, hidden_channels), jnp.float32)
            lb = 0.1 * jax.random.normal(
                keys[next(ki)], (num_node_types, 1, hidden_channels), jnp.float32)
            ew = 0.1 * jax.random.normal(
                keys[next(ki)], (num_edge_types, edge_dim), jnp.float32)
            eb = 0.1 * jax.random.normal(
                keys[next(ki)], (1, num_edge_types), jnp.float32)
            gamma = jnp.ones((1, hidden_channels), jnp.float32)
            beta = jnp.zeros((1, hidden_channels), jnp.float32)
            self.layers.append(dict(lw=lw, lb=lb, ew=ew, eb=eb,
                                    gamma=gamma, beta=beta))
        self.fc_w = 0.1 * jax.random.normal(
            keys[next(ki)], (hidden_channels, out_channels), jnp.float32)
        self.fc_b = 0.1 * jax.random.normal(
            keys[next(ki)], (1, out_channels), jnp.float32)

        # ---- pack padded, layer-stacked parameters once (graph independent) ----
        fp, tn, hid, L = self.f_pad, num_node_types, hidden_channels, num_layers
        lw_pack = jnp.zeros((L, fp, tn * fp), jnp.float32)
        lb_pack = jnp.zeros((L, 1, tn * fp), jnp.float32)
        gamma_pack = jnp.zeros((L, 1, fp), jnp.float32)
        beta_pack = jnp.zeros((L, 1, fp), jnp.float32)
        for l, p in enumerate(self.layers):
            f_in = p["lw"].shape[1]
            for t in range(tn):
                lw_pack = lw_pack.at[l, :f_in, t * fp:t * fp + hid].set(p["lw"][t])
                lb_pack = lb_pack.at[l, 0, t * fp:t * fp + hid].set(p["lb"][t, 0])
            gamma_pack = gamma_pack.at[l, 0, :hid].set(p["gamma"][0])
            beta_pack = beta_pack.at[l, 0, :hid].set(p["beta"][0])
        # bf16 operands for the MXU epilogue matmuls (f32 accumulation in-kernel)
        self.lw_pack = lw_pack.astype(jnp.bfloat16)
        self.lb_pack = lb_pack
        self.gamma_pack, self.beta_pack = gamma_pack, beta_pack

        self.fcw_pack = jnp.zeros((fp, self.o_pad), jnp.float32).at[
            :hid, :out_channels].set(self.fc_w).astype(jnp.bfloat16)
        self.fcb_pack = jnp.zeros((1, self.o_pad), jnp.float32).at[
            :, :out_channels].set(self.fc_b)

        # per-layer residual-add gates (residual only applies when shapes match)
        flags = jnp.asarray(
            [1.0 if (residual and (l > 0 or in_channels == hidden_channels)) else 0.0
             for l in range(L)], jnp.float32)
        self.res_flags = jnp.tile(flags.reshape(L, 1, 1), (1, 1, fp))

    # ------------------------------------------------------------------ forward
    def __call__(self, x, edge_index, edge_attr, node_type=None, edge_type=None):
        n = x.shape[0]
        e = edge_index.shape[1]
        if node_type is None:
            node_type = jnp.zeros((n,), jnp.int32)
        if edge_type is None:
            edge_type = jnp.zeros((e,), jnp.int32)

        fp, op = self.f_pad, self.o_pad
        tn, L = self.num_node_types, self.num_layers
        hid = self.hidden_channels
        n_pad = _round_up(max(n, 1), 128)
        e_min = _round_up(max(e, 1), 128)

        # ---- generation-aware VMEM budget & tile/residency selection -----------
        vmem_cap = _vmem_capacity_bytes()          # 128 MiB on v5e/v6e, 64 MiB on v7x
        budget = int(0.75 * vmem_cap)

        def vmem_demand(e_tile, e_pad, resident):
            # conservative: assume 2 pipeline buffers for every BlockSpec operand
            g = 2 * (2 * e_pad * n_pad * 2) if resident else 2 * (2 * e_tile * n_pad * 2)
            fixed = (2 * fp * (tn * fp) * 2            # stacked Linear W (bf16)
                     + 2 * (tn * fp) * 4               # stacked Linear b
                     + 3 * 2 * fp * 4                  # gamma / beta / residual gate
                     + 2 * n_pad * tn * 4              # node-type one-hot
                     + 2 * fp * op * 2 + 2 * op * 4    # fc_out W (bf16) / b
                     + 2 * n_pad * op * 4              # output block
                     + n_pad * fp * (4 + 2 + 4))       # h_f32 / h_bf16 / aggr scratch
            work = 3 * e_tile * fp * 4                 # diff / msg / temporaries headroom
            return g + fixed + work + 2 * e_tile * 4

        candidates = [t for t in (4096, 2048, 1024, 512, 256, 128) if t <= e_min]
        chosen = None
        for t in candidates:        # prefer resident operators: read once, not per layer
            ep = _round_up(e_min, t)
            if vmem_demand(t, ep, True) <= budget:
                chosen = (t, True)
                break
        if chosen is None:
            for t in candidates:    # fall back to per-layer streamed tiles
                ep = _round_up(e_min, t)
                if vmem_demand(t, ep, False) <= budget:
                    chosen = (t, False)
                    break
        if chosen is None:
            chosen = (128, False)
        e_tile, resident = chosen
        e_pad = _round_up(e_min, e_tile)
        n_etiles = e_pad // e_tile
        demand = vmem_demand(e_tile, e_pad, resident)
        vmem_limit = int(min(max(budget, demand + (4 << 20)), vmem_cap))

        # --- plain-JAX glue: padding, exact +-1/0 gather/scatter operators ------
        x_pad = jnp.zeros((n_pad, fp), jnp.float32).at[
            :n, :self.in_channels].set(x.astype(jnp.float32))

        src = jnp.full((e_pad,), -1, jnp.int32).at[:e].set(edge_index[0].astype(jnp.int32))
        dst = jnp.full((e_pad,), -1, jnp.int32).at[:e].set(edge_index[1].astype(jnp.int32))
        oh_src = jax.nn.one_hot(src, n_pad, dtype=jnp.float32)   # padded edges -> zero rows
        oh_dst = jax.nn.one_hot(dst, n_pad, dtype=jnp.float32)
        g_diff3 = (oh_src - oh_dst).astype(jnp.bfloat16).reshape(n_etiles, e_tile, n_pad)
        g_dstT3 = jnp.transpose(
            oh_dst.astype(jnp.bfloat16).reshape(n_etiles, e_tile, n_pad), (0, 2, 1))

        # per-layer per-edge Softplus(Linear_{edge_type}(edge_attr)) computed once
        # here -> lane-dense [L, E_pad, 1] stream; padded edges get w = 0.
        etype = edge_type.astype(jnp.int32)
        ea_f32 = edge_attr.astype(jnp.float32)
        w_layers = []
        for p in self.layers:
            w_all = _softplus(ea_f32 @ p["ew"].T + p["eb"])               # [E, Te]
            w_sel = jnp.take_along_axis(w_all, etype[:, None], axis=1)    # [E, 1]
            w_layers.append(jnp.zeros((e_pad, 1), jnp.float32).at[:e, :].set(w_sel))
        w_pack = jnp.stack(w_layers, axis=0)                              # [L, Ep, 1]

        ntype_oh = jnp.zeros((n_pad, tn), jnp.float32).at[:n].set(
            jax.nn.one_hot(node_type, tn, dtype=jnp.float32))

        if resident:
            gdiff_spec = pl.BlockSpec((n_etiles, e_tile, n_pad), lambda l, t: (0, 0, 0))
            gdstT_spec = pl.BlockSpec((n_etiles, n_pad, e_tile), lambda l, t: (0, 0, 0))
        else:
            gdiff_spec = pl.BlockSpec((None, e_tile, n_pad), lambda l, t: (t, 0, 0))
            gdstT_spec = pl.BlockSpec((None, n_pad, e_tile), lambda l, t: (t, 0, 0))

        # --- advisory cost estimate ---------------------------------------------
        flops = int(L * (4 * e_pad * n_pad * fp + 2 * n_pad * fp * (tn * fp))
                    + 2 * n_pad * fp * op)
        transcendentals = int(L * n_pad)
        g_reads = 1 if resident else L
        bytes_acc = int(g_reads * 2 * e_pad * n_pad * 2
                        + L * (e_pad * 4 + fp * (tn * fp) * 2 + (tn * fp) * 4 + 3 * fp * 4)
                        + n_pad * fp * 4 + n_pad * tn * 4
                        + fp * op * 2 + op * 4 + n_pad * op * 4)

        kernel = functools.partial(
            fused_gnn_kernel, num_node_types=tn, hidden=hid, f_pad=fp,
            eps=self.eps, resident=resident)

        out_pad = pl.pallas_call(
            kernel,
            grid_spec=pltpu.PrefetchScalarGridSpec(
                num_scalar_prefetch=0,
                grid=(L, n_etiles),
                in_specs=[
                    pl.BlockSpec(memory_space=pl.ANY),                          # x (HBM, DMA'd once)
                    gdiff_spec,                                                 # G_diff
                    gdstT_spec,                                                 # G_dst^T
                    pl.BlockSpec((None, e_tile, 1), lambda l, t: (l, t, 0)),    # per-edge weights
                    pl.BlockSpec((n_pad, tn), lambda l, t: (0, 0)),             # node-type one-hot
                    pl.BlockSpec((None, fp, tn * fp), lambda l, t: (l, 0, 0)),  # stacked Linear W (bf16)
                    pl.BlockSpec((None, 1, tn * fp), lambda l, t: (l, 0, 0)),   # stacked Linear b
                    pl.BlockSpec((None, 1, fp), lambda l, t: (l, 0, 0)),        # LN gamma
                    pl.BlockSpec((None, 1, fp), lambda l, t: (l, 0, 0)),        # LN beta
                    pl.BlockSpec((None, 1, fp), lambda l, t: (l, 0, 0)),        # residual gate
                    pl.BlockSpec((fp, op), lambda l, t: (0, 0)),                # fc_out W (bf16)
                    pl.BlockSpec((1, op), lambda l, t: (0, 0)),                 # fc_out b
                ],
                out_specs=pl.BlockSpec((n_pad, op), lambda l, t: (0, 0)),
                scratch_shapes=[
                    pltpu.VMEM((n_pad, fp), jnp.float32),    # node state h (layer carry)
                    pltpu.VMEM((n_pad, fp), jnp.bfloat16),   # bf16 mirror (MXU gather operand)
                    pltpu.VMEM((n_pad, fp), jnp.float32),    # scatter-add accumulator
                    pltpu.SemaphoreType.DMA,                 # x -> h one-time copy
                ]),
            out_shape=jax.ShapeDtypeStruct((n_pad, op), jnp.float32),
            compiler_params=pltpu.CompilerParams(
                dimension_semantics=("arbitrary", "arbitrary"),
                vmem_limit_bytes=vmem_limit),
            cost_estimate=pl.CostEstimate(
                flops=flops, transcendentals=transcendentals,
                bytes_accessed=bytes_acc),
        )(x_pad, g_diff3, g_dstT3, w_pack, ntype_oh,
          self.lw_pack, self.lb_pack, self.gamma_pack, self.beta_pack,
          self.res_flags, self.fcw_pack, self.fcb_pack)

        return out_pad[:n, :self.out_channels]

    # ------------------------------------------------------- pure-JAX reference
    def reference(self, x, edge_index, edge_attr, node_type=None, edge_type=None):
        n = x.shape[0]
        e = edge_index.shape[1]
        if node_type is None:
            node_type = jnp.zeros((n,), jnp.int32)
        if edge_type is None:
            edge_type = jnp.zeros((e,), jnp.int32)
        src, dst = edge_index[0], edge_index[1]
        h = x.astype(jnp.float32)
        for p in self.layers:
            identity = h
            x_j, x_i = h[src], h[dst]
            w_all = _softplus(edge_attr.astype(jnp.float32) @ p["ew"].T + p["eb"])
            w = jnp.take_along_axis(w_all, edge_type[:, None].astype(jnp.int32), axis=1)
            msg = w * (x_j - x_i)
            aggr = jnp.zeros((n, h.shape[1]), jnp.float32).at[dst].add(msg)
            outs = jnp.stack([aggr @ p["lw"][t] + p["lb"][t]
                              for t in range(self.num_node_types)], 0)
            h = outs[node_type, jnp.arange(n)]
            h = jnp.maximum(h, 0.0)
            mu = jnp.mean(h, axis=-1, keepdims=True)
            var = jnp.mean((h - mu) ** 2, axis=-1, keepdims=True)
            h = (h - mu) * jax.lax.rsqrt(var + self.eps)
            h = h * p["gamma"] + p["beta"]
            if self.residual and identity.shape == h.shape:
                h = h + identity
        return h @ self.fc_w + self.fc_b


if __name__ == "__main__":
    key = jax.random.PRNGKey(0)
    k_x, k_ei, k_ea, k_nt, k_et = jax.random.split(key, 5)

    N, E = 16, 32
    IN_C, HID, OUT_C, EDGE_DIM = 8, 32, 16, 4
    NUM_NODE_TYPES, NUM_EDGE_TYPES = 2, 2

    x = jax.random.normal(k_x, (N, IN_C), jnp.float32)
    edge_index = jax.random.randint(k_ei, (2, E), 0, N, dtype=jnp.int32)
    edge_attr = jax.random.normal(k_ea, (E, EDGE_DIM), jnp.float32)
    node_type = jax.random.randint(k_nt, (N,), 0, NUM_NODE_TYPES, dtype=jnp.int32)
    edge_type = jax.random.randint(k_et, (E,), 0, NUM_EDGE_TYPES, dtype=jnp.int32)

    model = EnhancedGNNEncoderPallas(
        in_channels=IN_C, hidden_channels=HID, out_channels=OUT_C,
        num_layers=2, edge_dim=EDGE_DIM,
        num_node_types=NUM_NODE_TYPES, num_edge_types=NUM_EDGE_TYPES,
        residual=False, key=jax.random.PRNGKey(42))

    out = model(x, edge_index, edge_attr, node_type, edge_type)
    jax.block_until_ready(out)
    assert out.shape == (N, OUT_C)
    assert bool(jnp.all(jnp.isfinite(out)))

    ref = model.reference(x, edge_index, edge_attr, node_type, edge_type)
    max_err = float(jnp.max(jnp.abs(out - ref)))
    assert jnp.allclose(out, ref, atol=1e-1, rtol=1e-1), max_err

    print("KERNEL_OK")
</pallas_src>

<mosaic_0001>
module attributes {stable_mosaic.version = 11 : i64} {
  func.func @fused_gnn_kernel(%arg0: i32, %arg1: i32, %arg2: memref<128x128xf32, #tpu.memory_space<any>>, %arg3: memref<1x128x128xbf16, #tpu.memory_space<vmem>>, %arg4: memref<1x128x128xbf16, #tpu.memory_space<vmem>>, %arg5: memref<1x128x1xf32, #tpu.memory_space<vmem>>, %arg6: memref<128x2xf32, #tpu.memory_space<vmem>>, %arg7: memref<1x128x256xbf16, #tpu.memory_space<vmem>>, %arg8: memref<1x1x256xf32, #tpu.memory_space<vmem>>, %arg9: memref<1x1x128xf32, #tpu.memory_space<vmem>>, %arg10: memref<1x1x128xf32, #tpu.memory_space<vmem>>, %arg11: memref<1x1x128xf32, #tpu.memory_space<vmem>>, %arg12: memref<128x128xbf16, #tpu.memory_space<vmem>>, %arg13: memref<1x128xf32, #tpu.memory_space<vmem>>, %arg14: memref<128x128xf32, #tpu.memory_space<vmem>>, %arg15: memref<128x128xf32, #tpu.memory_space<vmem>>, %arg16: memref<128x128xbf16, #tpu.memory_space<vmem>>, %arg17: memref<128x128xf32, #tpu.memory_space<vmem>>, %arg18: memref<!tpu.dma_semaphore, #tpu.memory_space<semaphore_mem>>) attributes {dimension_semantics = [#tpu.dimension_semantics<arbitrary>, #tpu.dimension_semantics<arbitrary>], iteration_bounds = array<i64: 2, 1>, scalar_prefetch = 0 : i64, scratch_operands = 4 : i64, tpu.core_type = #tpu.core_type<tc>, window_params = [{}, {pipeline_mode = #tpu.pipeline_mode<synchronous>, transform_indices = @transform_1, window_bounds = array<i64: 1, 128, 128>}, {pipeline_mode = #tpu.pipeline_mode<synchronous>, transform_indices = @transform_2, window_bounds = array<i64: 1, 128, 128>}, {transform_indices = @transform_3, window_bounds = array<i64: 1, 128, 1>}, {pipeline_mode = #tpu.pipeline_mode<synchronous>, transform_indices = @transform_4, window_bounds = array<i64: 128, 2>}, {transform_indices = @transform_5, window_bounds = array<i64: 1, 128, 256>}, {transform_indices = @transform_6, window_bounds = array<i64: 1, 1, 256>}, {transform_indices = @transform_7, window_bounds = array<i64: 1, 1, 128>}, {transform_indices = @transform_8, window_bounds = array<i64: 1, 1, 128>}, {transform_indices = @transform_9, window_bounds = array<i64: 1, 1, 128>}, {pipeline_mode = #tpu.pipeline_mode<synchronous>, transform_indices = @transform_10, window_bounds = array<i64: 128, 128>}, {pipeline_mode = #tpu.pipeline_mode<synchronous>, transform_indices = @transform_11, window_bounds = array<i64: 1, 128>}, {pipeline_mode = #tpu.pipeline_mode<synchronous>, transform_indices = @transform_12, window_bounds = array<i64: 128, 128>}]} {
    %c0_i32 = arith.constant 0 : i32
    %0 = arith.cmpi eq, %arg0, %c0_i32 : i32
    %c0_i32_0 = arith.constant 0 : i32
    %1 = arith.cmpi eq, %arg1, %c0_i32_0 : i32
    %2 = arith.andi %0, %1 : i1
    %3 = arith.extui %2 : i1 to i32
    %c0_i32_1 = arith.constant 0 : i32
    %4 = arith.cmpi ne, %3, %c0_i32_1 : i32
    scf.if %4 {
      tpu.enqueue_dma source(%arg2 : memref<128x128xf32, #tpu.memory_space<any>>) target(%arg15 : memref<128x128xf32, #tpu.memory_space<vmem>>) target_semaphore(%arg18 : memref<!tpu.dma_semaphore, #tpu.memory_space<semaphore_mem>>)
      tpu.wait_dma2 semaphore(%arg18 : memref<!tpu.dma_semaphore, #tpu.memory_space<semaphore_mem>>) src(%arg2 : memref<128x128xf32, #tpu.memory_space<any>>) dst(%arg15 : memref<128x128xf32, #tpu.memory_space<vmem>>)
    } else {
    }
    %c0_i32_2 = arith.constant 0 : i32
    %5 = arith.cmpi eq, %arg1, %c0_i32_2 : i32
    %6 = arith.extui %5 : i1 to i32
    %c0_i32_3 = arith.constant 0 : i32
    %7 = arith.cmpi ne, %6, %c0_i32_3 : i32
    scf.if %7 {
      %c0_21 = arith.constant 0 : index
      %c0_22 = arith.constant 0 : index
      %36 = vector.load %arg15[%c0_21, %c0_22] : memref<128x128xf32, #tpu.memory_space<vmem>>, vector<128x128xf32>
      %37 = arith.truncf %36 : vector<128x128xf32> to vector<128x128xbf16>
      %c0_23 = arith.constant 0 : index
      %c0_24 = arith.constant 0 : index
      %38 = vector.load %arg16[%c0_23, %c0_24] : memref<128x128xbf16, #tpu.memory_space<vmem>>, vector<128x128xbf16>
      tpu.vector_store %arg16[%c0_23, %c0_24], %37 {strides = array<i32>} : memref<128x128xbf16, #tpu.memory_space<vmem>>, vector<128x128xbf16>,
    } else {
    }
    %8 = arith.index_cast %arg1 : i32 to index
    %c0 = arith.constant 0 : index
    %c0_4 = arith.constant 0 : index
    %9 = vector.load %arg3[%8, %c0, %c0_4] : memref<1x128x128xbf16, #tpu.memory_space<vmem>>, vector<1x128x128xbf16>
    %10 = vector.shape_cast %9 : vector<1x128x128xbf16> to vector<128x128xbf16>
    %11 = arith.index_cast %arg1 : i32 to index
    %c0_5 = arith.constant 0 : index
    %c0_6 = arith.constant 0 : index
    %12 = vector.load %arg4[%11, %c0_5, %c0_6] : memref<1x128x128xbf16, #tpu.memory_space<vmem>>, vector<1x128x128xbf16>
    %13 = vector.shape_cast %12 : vector<1x128x128xbf16> to vector<128x128xbf16>
    %c0_7 = arith.constant 0 : index
    %c0_8 = arith.constant 0 : index
    %14 = vector.load %arg16[%c0_7, %c0_8] : memref<128x128xbf16, #tpu.memory_space<vmem>>, vector<128x128xbf16>
    %cst = arith.constant dense<0.000000e+00> : vector<128x128xf32>
    %15 = tpu.matmul %10, %14, %cst {dimension_numbers = #tpu.dot_dimension_numbers<[1], [0], [0], [1], [0, 0, 1, 1], [], []>} : vector<128x128xbf16>, vector<128x128xbf16>, vector<128x128xf32> -> vector<128x128xf32>
    %c0_9 = arith.constant 0 : index
    %c0_10 = arith.constant 0 : index
    %c0_11 = arith.constant 0 : index
    %16 = vector.load %arg5[%c0_9, %c0_10, %c0_11] : memref<1x128x1xf32, #tpu.memory_space<vmem>>, vector<1x128x1xf32>
    %17 = vector.shape_cast %16 : vector<1x128x1xf32> to vector<128x1xf32>
    %18 = vector.broadcast %17 : vector<128x1xf32> to vector<128x128xf32>
    %19 = arith.mulf %18, %15 : vector<128x128xf32>
    %20 = arith.truncf %19 : vector<128x128xf32> to vector<128x128xbf16>
    %cst_12 = arith.constant dense<0.000000e+00> : vector<128x128xf32>
    %21 = tpu.matmul %13, %20, %cst_12 {dimension_numbers = #tpu.dot_dimension_numbers<[1], [0], [0], [1], [0, 0, 1, 1], [], []>} : vector<128x128xbf16>, vector<128x128xbf16>, vector<128x128xf32> -> vector<128x128xf32>
    %c0_i32_13 = arith.constant 0 : i32
    %22 = arith.cmpi eq, %arg1, %c0_i32_13 : i32
    %23 = arith.extui %22 : i1 to i32
    %c0_i32_14 = arith.constant 0 : i32
    %24 = arith.cmpi ne, %23, %c0_i32_14 : i32
    scf.if %24 {
      %c0_21 = arith.constant 0 : index
      %c0_22 = arith.constant 0 : index
      %36 = vector.load %arg17[%c0_21, %c0_22] : memref<128x128xf32, #tpu.memory_space<vmem>>, vector<128x128xf32>
      tpu.vector_store %arg17[%c0_21, %c0_22], %21 {strides = array<i32>} : memref<128x128xf32, #tpu.memory_space<vmem>>, vector<128x128xf32>,
    } else {
    }
    %c0_i32_15 = arith.constant 0 : i32
    %25 = arith.cmpi ne, %arg1, %c0_i32_15 : i32
    %26 = arith.extui %25 : i1 to i32
    %c0_i32_16 = arith.constant 0 : i32
    %27 = arith.cmpi ne, %26, %c0_i32_16 : i32
    scf.if %27 {
      %c0_21 = arith.constant 0 : index
      %c0_22 = arith.constant 0 : index
      %36 = vector.load %arg17[%c0_21, %c0_22] : memref<128x128xf32, #tpu.memory_space<vmem>>, vector<128x128xf32>
      %37 = arith.addf %36, %21 : vector<128x128xf32>
      %c0_23 = arith.constant 0 : index
      %c0_24 = arith.constant 0 : index
      %38 = vector.load %arg17[%c0_23, %c0_24] : memref<128x128xf32, #tpu.memory_space<vmem>>, vector<128x128xf32>
      tpu.vector_store %arg17[%c0_23, %c0_24], %37 {strides = array<i32>} : memref<128x128xf32, #tpu.memory_space<vmem>>, vector<128x128xf32>,
    } else {
    }
    %c0_i32_17 = arith.constant 0 : i32
    %28 = arith.cmpi eq, %arg1, %c0_i32_17 : i32
    %29 = arith.extui %28 : i1 to i32
    %c0_i32_18 = arith.constant 0 : i32
    %30 = arith.cmpi ne, %29, %c0_i32_18 : i32
    scf.if %30 {
      %c0_21 = arith.constant 0 : index
      %c0_22 = arith.constant 0 : index
      %36 = vector.load %arg17[%c0_21, %c0_22] : memref<128x128xf32, #tpu.memory_space<vmem>>, vector<128x128xf32>
      %37 = arith.truncf %36 : vector<128x128xf32> to vector<128x128xbf16>
      %c0_23 = arith.constant 0 : index
      %c0_24 = arith.constant 0 : index
      %c0_25 = arith.constant 0 : index
      %38 = vector.load %arg7[%c0_23, %c0_24, %c0_25] : memref<1x128x256xbf16, #tpu.memory_space<vmem>>, vector<1x128x256xbf16>
      %39 = vector.shape_cast %38 : vector<1x128x256xbf16> to vector<128x256xbf16>
      %cst_26 = arith.constant dense<0.000000e+00> : vector<128x256xf32>
      %40 = tpu.matmul %37, %39, %cst_26 {dimension_numbers = #tpu.dot_dimension_numbers<[1], [0], [0], [1], [0, 0, 1, 1], [], []>} : vector<128x128xbf16>, vector<128x256xbf16>, vector<128x256xf32> -> vector<128x256xf32>
      %c0_27 = arith.constant 0 : index
      %c0_28 = arith.constant 0 : index
      %c0_29 = arith.constant 0 : index
      %41 = vector.load %arg8[%c0_27, %c0_28, %c0_29] : memref<1x1x256xf32, #tpu.memory_space<vmem>>, vector<1x1x256xf32>
      %42 = vector.shape_cast %41 : vector<1x1x256xf32> to vector<1x256xf32>
      %43 = vector.broadcast %42 : vector<1x256xf32> to vector<128x256xf32>
      %44 = arith.addf %40, %43 : vector<128x256xf32>
      %c0_30 = arith.constant 0 : index
      %c0_31 = arith.constant 0 : index
      %45 = vector.load %arg6[%c0_30, %c0_31] : memref<128x2xf32, #tpu.memory_space<vmem>>, vector<128x2xf32>
      %46 = vector.extract_strided_slice %45 {offsets = [0, 0], sizes = [128, 1], strides = [1, 1]} : vector<128x2xf32> to vector<128x1xf32>
      %47 = vector.extract_strided_slice %44 {offsets = [0, 0], sizes = [128, 128], strides = [1, 1]} : vector<128x256xf32> to vector<128x128xf32>
      %48 = vector.broadcast %46 : vector<128x1xf32> to vector<128x128xf32>
      %49 = arith.mulf %48, %47 : vector<128x128xf32>
      %50 = vector.extract_strided_slice %45 {offsets = [0, 1], sizes = [128, 1], strides = [1, 1]} : vector<128x2xf32> to vector<128x1xf32>
      %51 = vector.extract_strided_slice %44 {offsets = [0, 128], sizes = [128, 128], strides = [1, 1]} : vector<128x256xf32> to vector<128x128xf32>
      %52 = vector.broadcast %50 : vector<128x1xf32> to vector<128x128xf32>
      %53 = arith.mulf %52, %51 : vector<128x128xf32>
      %54 = arith.addf %49, %53 : vector<128x128xf32>
      %cst_32 = arith.constant 0.000000e+00 : f32
      %55 = vector.broadcast %cst_32 : f32 to vector<128x128xf32>
      %56 = arith.maximumf %54, %55 : vector<128x128xf32>
      %57 = tpu.iota {dimensions = array<i32: 1>} : vector<1x128xi32>
      %c32_i32 = arith.constant 32 : i32
      %58 = vector.broadcast %c32_i32 : i32 to vector<1x128xi32>
      %59 = arith.cmpi slt, %57, %58 : vector<1x128xi32>
      %60 = arith.extui %59 : vector<1x128xi1> to vector<1x128xi32>
      %61 = arith.sitofp %60 : vector<1x128xi32> to vector<1x128xf32>
      %62 = vector.broadcast %61 : vector<1x128xf32> to vector<128x128xf32>
      %63 = arith.mulf %56, %62 : vector<128x128xf32>
      %cst_33 = arith.constant dense<0.000000e+00> : vector<128xf32>
      %64 = vector.multi_reduction <add>, %63, %cst_33 [1] : vector<128x128xf32> to vector<128xf32>
      %65 = vector.shape_cast %64 : vector<128xf32> to vector<128x1xf32>
      %cst_34 = arith.constant 3.125000e-02 : f32
      %66 = vector.broadcast %cst_34 : f32 to vector<128x1xf32>
      %67 = arith.mulf %65, %66 : vector<128x1xf32>
      %68 = vector.broadcast %67 : vector<128x1xf32> to vector<128x128xf32>
      %69 = arith.subf %63, %68 : vector<128x128xf32>
      %70 = vector.broadcast %61 : vector<1x128xf32> to vector<128x128xf32>
      %71 = arith.mulf %69, %70 : vector<128x128xf32>
      %72 = arith.mulf %71, %71 : vector<128x128xf32>
      %cst_35 = arith.constant dense<0.000000e+00> : vector<128xf32>
      %73 = vector.multi_reduction <add>, %72, %cst_35 [1] : vector<128x128xf32> to vector<128xf32>
      %74 = vector.shape_cast %73 : vector<128xf32> to vector<128x1xf32>
      %cst_36 = arith.constant 3.125000e-02 : f32
      %75 = vector.broadcast %cst_36 : f32 to vector<128x1xf32>
      %76 = arith.mulf %74, %75 : vector<128x1xf32>
      %cst_37 = arith.constant 9.99999974E-6 : f32
      %77 = vector.broadcast %cst_37 : f32 to vector<128x1xf32>
      %78 = arith.addf %76, %77 : vector<128x1xf32>
      %79 = math.rsqrt %78 : vector<128x1xf32>
      %80 = vector.broadcast %79 : vector<128x1xf32> to vector<128x128xf32>
      %81 = arith.mulf %71, %80 : vector<128x128xf32>
      %c0_38 = arith.constant 0 : index
      %c0_39 = arith.constant 0 : index
      %c0_40 = arith.constant 0 : index
      %82 = vector.load %arg9[%c0_38, %c0_39, %c0_40] : memref<1x1x128xf32, #tpu.memory_space<vmem>>, vector<1x1x128xf32>
      %83 = vector.shape_cast %82 : vector<1x1x128xf32> to vector<1x128xf32>
      %84 = vector.broadcast %83 : vector<1x128xf32> to vector<128x128xf32>
      %85 = arith.mulf %81, %84 : vector<128x128xf32>
      %c0_41 = arith.constant 0 : index
      %c0_42 = arith.constant 0 : index
      %c0_43 = arith.constant 0 : index
      %86 = vector.load %arg10[%c0_41, %c0_42, %c0_43] : memref<1x1x128xf32, #tpu.memory_space<vmem>>, vector<1x1x128xf32>
      %87 = vector.shape_cast %86 : vector<1x1x128xf32> to vector<1x128xf32>
      %88 = vector.broadcast %87 : vector<1x128xf32> to vector<128x128xf32>
      %89 = arith.addf %85, %88 : vector<128x128xf32>
      %c0_44 = arith.constant 0 : index
      %c0_45 = arith.constant 0 : index
      %c0_46 = arith.constant 0 : index
      %90 = vector.load %arg11[%c0_44, %c0_45, %c0_46] : memref<1x1x128xf32, #tpu.memory_space<vmem>>, vector<1x1x128xf32>
      %91 = vector.shape_cast %90 : vector<1x1x128xf32> to vector<1x128xf32>
      %c0_47 = arith.constant 0 : index
      %c0_48 = arith.constant 0 : index
      %92 = vector.load %arg15[%c0_47, %c0_48] : memref<128x128xf32, #tpu.memory_space<vmem>>, vector<128x128xf32>
      %93 = vector.broadcast %91 : vector<1x128xf32> to vector<128x128xf32>
      %94 = arith.mulf %93, %92 : vector<128x128xf32>
      %95 = arith.addf %89, %94 : vector<128x128xf32>
      %c0_49 = arith.constant 0 : index
      %c0_50 = arith.constant 0 : index
      %96 = vector.load %arg15[%c0_49, %c0_50] : memref<128x128xf32, #tpu.memory_space<vmem>>, vector<128x128xf32>
      tpu.vector_store %arg15[%c0_49, %c0_50], %95 {strides = array<i32>} : memref<128x128xf32, #tpu.memory_space<vmem>>, vector<128x128xf32>,
    } else {
    }
    %c1_i32 = arith.constant 1 : i32
    %31 = arith.cmpi eq, %arg0, %c1_i32 : i32
    %c0_i32_19 = arith.constant 0 : i32
    %32 = arith.cmpi eq, %arg1, %c0_i32_19 : i32
    %33 = arith.andi %31, %32 : i1
    %34 = arith.extui %33 : i1 to i32
    %c0_i32_20 = arith.constant 0 : i32
    %35 = arith.cmpi ne, %34, %c0_i32_20 : i32
    scf.if %35 {
      %c0_21 = arith.constant 0 : index
      %c0_22 = arith.constant 0 : index
      %36 = vector.load %arg15[%c0_21, %c0_22] : memref<128x128xf32, #tpu.memory_space<vmem>>, vector<128x128xf32>
      %37 = arith.truncf %36 : vector<128x128xf32> to vector<128x128xbf16>
      %c0_23 = arith.constant 0 : index
      %c0_24 = arith.constant 0 : index
      %38 = vector.load %arg12[%c0_23, %c0_24] : memref<128x128xbf16, #tpu.memory_space<vmem>>, vector<128x128xbf16>
      %cst_25 = arith.constant dense<0.000000e+00> : vector<128x128xf32>
      %39 = tpu.matmul %37, %38, %cst_25 {dimension_numbers = #tpu.dot_dimension_numbers<[1], [0], [0], [1], [0, 0, 1, 1], [], []>} : vector<128x128xbf16>, vector<128x128xbf16>, vector<128x128xf32> -> vector<128x128xf32>
      %c0_26 = arith.constant 0 : index
      %c0_27 = arith.constant 0 : index
      %40 = vector.load %arg13[%c0_26, %c0_27] : memref<1x128xf32, #tpu.memory_space<vmem>>, vector<1x128xf32>
      %41 = vector.broadcast %40 : vector<1x128xf32> to vector<128x128xf32>
      %42 = arith.addf %39, %41 : vector<128x128xf32>
      %c0_28 = arith.constant 0 : index
      %c0_29 = arith.constant 0 : index
      %43 = vector.load %arg14[%c0_28, %c0_29] : memref<128x128xf32, #tpu.memory_space<vmem>>, vector<128x128xf32>
      tpu.vector_store %arg14[%c0_28, %c0_29], %42 {strides = array<i32>} : memref<128x128xf32, #tpu.memory_space<vmem>>, vector<128x128xf32>,
    } else {
    }
    return
  }
  func.func @transform_1(%arg0: i32, %arg1: i32) -> (i32, i32, i32) {
    %c0_i32 = arith.constant 0 : i32
    %c0_i32_0 = arith.constant 0 : i32
    %c0_i32_1 = arith.constant 0 : i32
    %c0_i32_2 = arith.constant 0 : i32
    return %c0_i32, %c0_i32_0, %c0_i32_1 : i32, i32, i32
  }
  func.func @transform_2(%arg0: i32, %arg1: i32) -> (i32, i32, i32) {
    %c0_i32 = arith.constant 0 : i32
    %c0_i32_0 = arith.constant 0 : i32
    %c0_i32_1 = arith.constant 0 : i32
    %c0_i32_2 = arith.constant 0 : i32
    return %c0_i32, %c0_i32_0, %c0_i32_1 : i32, i32, i32
  }
  func.func @transform_3(%arg0: i32, %arg1: i32) -> (i32, i32, i32) {
    %c0_i32 = arith.constant 0 : i32
    %c0_i32_0 = arith.constant 0 : i32
    return %arg0, %arg1, %c0_i32 : i32, i32, i32
  }
  func.func @transform_4(%arg0: i32, %arg1: i32) -> (i32, i32) {
    %c0_i32 = arith.constant 0 : i32
    %c0_i32_0 = arith.constant 0 : i32
    %c0_i32_1 = arith.constant 0 : i32
    return %c0_i32, %c0_i32_0 : i32, i32
  }
  func.func @transform_5(%arg0: i32, %arg1: i32) -> (i32, i32, i32) {
    %c0_i32 = arith.constant 0 : i32
    %c0_i32_0 = arith.constant 0 : i32
    %c0_i32_1 = arith.constant 0 : i32
    return %arg0, %c0_i32, %c0_i32_0 : i32, i32, i32
  }
  func.func @transform_6(%arg0: i32, %arg1: i32) -> (i32, i32, i32) {
    %c0_i32 = arith.constant 0 : i32
    %c0_i32_0 = arith.constant 0 : i32
    %c0_i32_1 = arith.constant 0 : i32
    return %arg0, %c0_i32, %c0_i32_0 : i32, i32, i32
  }
  func.func @transform_7(%arg0: i32, %arg1: i32) -> (i32, i32, i32) {
    %c0_i32 = arith.constant 0 : i32
    %c0_i32_0 = arith.constant 0 : i32
    %c0_i32_1 = arith.constant 0 : i32
    return %arg0, %c0_i32, %c0_i32_0 : i32, i32, i32
  }
  func.func @transform_8(%arg0: i32, %arg1: i32) -> (i32, i32, i32) {
    %c0_i32 = arith.constant 0 : i32
    %c0_i32_0 = arith.constant 0 : i32
    %c0_i32_1 = arith.constant 0 : i32
    return %arg0, %c0_i32, %c0_i32_0 : i32, i32, i32
  }
  func.func @transform_9(%arg0: i32, %arg1: i32) -> (i32, i32, i32) {
    %c0_i32 = arith.constant 0 : i32
    %c0_i32_0 = arith.constant 0 : i32
    %c0_i32_1 = arith.constant 0 : i32
    return %arg0, %c0_i32, %c0_i32_0 : i32, i32, i32
  }
  func.func @transform_10(%arg0: i32, %arg1: i32) -> (i32, i32) {
    %c0_i32 = arith.constant 0 : i32
    %c0_i32_0 = arith.constant 0 : i32
    %c0_i32_1 = arith.constant 0 : i32
    return %c0_i32, %c0_i32_0 : i32, i32
  }
  func.func @transform_11(%arg0: i32, %arg1: i32) -> (i32, i32) {
    %c0_i32 = arith.constant 0 : i32
    %c0_i32_0 = arith.constant 0 : i32
    %c0_i32_1 = arith.constant 0 : i32
    return %c0_i32, %c0_i32_0 : i32, i32
  }
  func.func @transform_12(%arg0: i32, %arg1: i32) -> (i32, i32) {
    %c0_i32 = arith.constant 0 : i32
    %c0_i32_0 = arith.constant 0 : i32
    %c0_i32_1 = arith.constant 0 : i32
    return %c0_i32, %c0_i32_0 : i32, i32
  }
}

</mosaic_0001>

<llo_original>
// kernel: tpu_custom_call.1
$region0: #{tpu_custom_call.1}
  #allocation0 [shape = 'u32[]', space=smem, size = 0x4, offset = 0x4, fixed_abs, tag = 'smem constant byte address 0x4 - core index']
  #allocation1 [shape = 'u32[72,128]{1,0:T(1,128)}', space=vmem, size = 0x9000, scoped, tag = 'internal scratch']
  #allocation2 [shape = 'f32[128,128]{1,0:T(8,128)}', space=vmem, size = 0x10000, scoped, tag = 'scratch operand']
  #allocation3 [shape = 'bf16[128,128]{1,0:T(8,128)(2,1)}', space=vmem, size = 0x8000, scoped, tag = 'scratch operand']
  #allocation4 [shape = 'f32[128,128]{1,0:T(8,128)}', space=vmem, size = 0x10000, scoped, tag = 'scratch operand']
  #allocation5 [shape = 's32[1]{0}', space=sflag, size = 0x4, scoped, tag = 'scratch operand']
  #allocation14 [shape = 's32[]', space=sflag, size = 0x4, offset = 0, fixed_abs, tag = 'sflag constant byte address 0x0 - dummy sync flag']
  %s0 = inlined_call_operand.vmem [shape: f32[128,128], index: 0, kind: input, shape index: {}]
  %s1 = inlined_call_operand.hbm [shape: bf16[1,128,128], index: 1, kind: input, shape index: {}]
  %s2 = inlined_call_operand.hbm [shape: bf16[1,128,128], index: 2, kind: input, shape index: {}]
  %s3 = inlined_call_operand.vmem [shape: f32[2,128,1], index: 3, kind: input, shape index: {}]
  %s4 = inlined_call_operand.vmem [shape: f32[128,2], index: 4, kind: input, shape index: {}]
  %s5 = inlined_call_operand.vmem [shape: bf16[2,128,256], index: 5, kind: input, shape index: {}]
  %s6 = inlined_call_operand.vmem [shape: f32[2,1,256], index: 6, kind: input, shape index: {}]
  %s7 = inlined_call_operand.vmem [shape: f32[2,1,128], index: 7, kind: input, shape index: {}]
  %s8 = inlined_call_operand.vmem [shape: f32[2,1,128], index: 8, kind: input, shape index: {}]
  %s9 = inlined_call_operand.hbm [shape: f32[2,1,128], index: 9, kind: input, shape index: {}]
  %s10 = inlined_call_operand.hbm [shape: bf16[128,128], index: 10, kind: input, shape index: {}]
  %s11 = inlined_call_operand.vmem [shape: f32[1,128], index: 11, kind: input, shape index: {}]
  %s12 = inlined_call_operand.hbm [shape: f32[128,128], index: 12, kind: output, shape index: {}]
  %s13 = sld [smem:[#allocation0]]
  $region136: #{tpu_custom_call.1} parent=0
    _
  %s15 = ssub.s32 1, %s13
  %s16 = scalar_select 0, %s15, %s13
  $region1: #{tpu_custom_call.1} parent=0
    #allocation6 [shape = 'u8[32768]{0}', space=vmem, size = 0x8000, scoped, tag = 'input window, operand 1, single buffered']
    #allocation7 [shape = 's32[2]{0}', space=sflag, size = 0x8, scoped, tag = 'scoped memory for tpu_custom_call.1']
    #allocation8 [shape = 's32[2]{0}', space=sflag, size = 0x8, scoped, tag = 'scoped memory for tpu_custom_call.1']
    #allocation9 [shape = 'u8[32768]{0}', space=vmem, size = 0x8000, scoped, tag = 'input window, operand 2, single buffered']
    #allocation10 [shape = 's32[1]{0}', space=sflag, size = 0x4, scoped, tag = 'scoped memory for tpu_custom_call.1']
    #allocation11 [shape = 'u8[1024]{0}', space=vmem, size = 0x400, scoped, tag = 'input window, operand 9']
    #allocation12 [shape = 'u8[32768]{0}', space=vmem, size = 0x8000, scoped, tag = 'input window, operand 10, single buffered']
    #allocation13 [shape = 'u8[65536]{0}', space=vmem, size = 0x10000, scoped, tag = 'output window, operand 0, single buffered']
    %17 = vsyncpa [#allocation7], 0
    %18 = vsyncpa [#allocation10], 0
    %19 = vsyncpa [#allocation8], 0
    loop: start=0, step=1, limit=4
    $region2: #{tpu_custom_call.1} parent=1 // loop_pre_header
      _
    $region3: #{tpu_custom_call.1} parent=1 // loop_header
      %s21 = sphi 0, %s25
      %p22 = scmp.ge.s32.totalorder %s21, 4
      %s28 = sphi 0, %s40
      %s29 = sphi 0, %s36
      %s30 = sphi 0, %s28
      %s31 = sphi 0, %s29
      %s32 = sphi 0, %s30
      %s33 = sphi 0, %s31
      %s41 = sphi 0, %s41
      %s43 = sphi 0, %s41
      %s44 = sphi 0, %s43
      %s58 = sphi 0, %s44
      %s62 = sphi 0, %s62
      %s64 = sphi 0, %s62
      %s65 = sphi 0, %s64
      %s79 = sphi 0, %s65
      %s87 = sphi 0, %s89
      %s90 = sphi 0, %s87
      %s91 = sphi 0, %s90
      %s107 = sphi 0, %s91
      %s111 = sphi 0, %s111
      %s113 = sphi 0, %s111
      %s114 = sphi 0, %s113
      %s128 = sphi 0, %s114
      %s134 = sphi 0, %s136
      %s137 = sphi 0, %s134
      %s138 = sphi 0, %s137
      %s154 = sphi 0, %s138
      %s160 = sphi 0, %s162
      %s163 = sphi 0, %s160
      %s164 = sphi 0, %s163
      %s180 = sphi 0, %s164
      %s186 = sphi 0, %s188
      %s189 = sphi 0, %s186
      %s190 = sphi 0, %s189
      %s206 = sphi 0, %s190
      %s212 = sphi 0, %s214
      %s215 = sphi 0, %s212
      %s216 = sphi 0, %s215
      %s232 = sphi 0, %s216
      %s238 = sphi 0, %s240
      %s241 = sphi 0, %s238
      %s242 = sphi 0, %s241
      %s258 = sphi 0, %s242
      %s262 = sphi 0, %s262
      %s264 = sphi 0, %s262
      %s265 = sphi 0, %s264
      %s279 = sphi 0, %s265
      %s283 = sphi 0, %s283
      %s285 = sphi 0, %s283
      %s286 = sphi 0, %s285
      %s300 = sphi 0, %s286
      %s304 = sphi 0, %s304
      %s306 = sphi 0, %s304
      %s307 = sphi 0, %s306
      %s321 = sphi 0, %s307
    $region4: #{tpu_custom_call.1} parent=1 // loop_header_branch
      %24 = sbr.rel (%p22) target = $region8
    $region5: #{tpu_custom_call.1} parent=1 // loop_body
      %s26 = ssub.s32 %s21, 1
      %s27 = ssub.s32 %s21, 2
      %s34 = sadd.s32 1, %s29
      %p35 = scmp.ge.s32.totalorder %s34, 1
      %s36 = scalar_select %p35, 0, %s34
      %s37 = sadd.s32 1, %s28
      %s38 = scalar_select %p35, %s37, %s28
      %p39 = scmp.ge.s32.totalorder %s38, 2
      %s40 = scalar_select %p39, 0, %s38
      %s42 = sadd.s32 %s41, 1
      %p45 = scmp.eq.s32.totalorder %s21, 1
      %p46 = scmp.ne.s32.totalorder %s41, %s43
      %p47 = scmp.eq.s32.totalorder %s21, 0
      %p48 = por %p46, %p47
      %p49 = scmp.ne.s32.totalorder %s41, %s43
      %p50 = scmp.eq.s32.totalorder %s26, 1
      %p51 = por %p49, %p50
      %p52 = scmp.ne.s32.totalorder %s43, %s44
      %p53 = scmp.eq.s32.totalorder %s26, 0
      %p54 = por %p52, %p53
      %p55 = scmp.ne.s32.totalorder %s43, %s44
      %p56 = scmp.eq.s32.totalorder %s27, 1
      %p57 = por %p55, %p56
      %p59 = scmp.ne.s32.totalorder %s44, %s58
      %p60 = scmp.eq.s32.totalorder %s27, 0
      %p61 = por %p59, %p60
      %s63 = sadd.s32 %s62, 1
      %p66 = scmp.eq.s32.totalorder %s21, 1
      %p67 = scmp.ne.s32.totalorder %s62, %s64
      %p68 = scmp.eq.s32.totalorder %s21, 0
      %p69 = por %p67, %p68
      %p70 = scmp.ne.s32.totalorder %s62, %s64
      %p71 = scmp.eq.s32.totalorder %s26, 1
      %p72 = por %p70, %p71
      %p73 = scmp.ne.s32.totalorder %s64, %s65
      %p74 = scmp.eq.s32.totalorder %s26, 0
      %p75 = por %p73, %p74
      %p76 = scmp.ne.s32.totalorder %s64, %s65
      %p77 = scmp.eq.s32.totalorder %s27, 1
      %p78 = por %p76, %p77
      %p80 = scmp.ne.s32.totalorder %s65, %s79
      %p81 = scmp.eq.s32.totalorder %s27, 0
      %p82 = por %p80, %p81
      %s83 = ssub.s32 %s28, %s40
      %s84 = ssub.s32 %s29, %s36
      %s85 = sor.u32 %s83, %s84
      %p86 = scmp.eq.s32.totalorder %s85, 0
      %s88 = sadd.s32 %s87, 1
      %s89 = scalar_select %p86, %s87, %s88
      %p92 = pneg %p86
      %p93 = scmp.eq.s32.totalorder %s21, 1
      %p94 = por %p92, %p93
      %p95 = scmp.ne.s32.totalorder %s87, %s90
      %p96 = scmp.eq.s32.totalorder %s21, 0
      %p97 = por %p95, %p96
      %p98 = scmp.ne.s32.totalorder %s87, %s90
      %p99 = scmp.eq.s32.totalorder %s26, 1
      %p100 = por %p98, %p99
      %p101 = scmp.ne.s32.totalorder %s90, %s91
      %p102 = scmp.eq.s32.totalorder %s26, 0
      %p103 = por %p101, %p102
      %p104 = scmp.ne.s32.totalorder %s90, %s91
      %p105 = scmp.eq.s32.totalorder %s27, 1
      %p106 = por %p104, %p105
      %p108 = scmp.ne.s32.totalorder %s91, %s107
      %p109 = scmp.eq.s32.totalorder %s27, 0
      %p110 = por %p108, %p109
      %s112 = sadd.s32 %s111, 1
      %p115 = scmp.eq.s32.totalorder %s21, 1
      %p116 = scmp.ne.s32.totalorder %s111, %s113
      %p117 = scmp.eq.s32.totalorder %s21, 0
      %p118 = por %p116, %p117
      %p119 = scmp.ne.s32.totalorder %s111, %s113
      %p120 = scmp.eq.s32.totalorder %s26, 1
      %p121 = por %p119, %p120
      %p122 = scmp.ne.s32.totalorder %s113, %s114
      %p123 = scmp.eq.s32.totalorder %s26, 0
      %p124 = por %p122, %p123
      %p125 = scmp.ne.s32.totalorder %s113, %s114
      %p126 = scmp.eq.s32.totalorder %s27, 1
      %p127 = por %p125, %p126
      %p129 = scmp.ne.s32.totalorder %s114, %s128
      %p130 = scmp.eq.s32.totalorder %s27, 0
      %p131 = por %p129, %p130
      %s132 = ssub.s32 %s28, %s40
      %p133 = scmp.eq.s32.totalorder %s132, 0
      %s135 = sadd.s32 %s134, 1
      %s136 = scalar_select %p133, %s134, %s135
      %p139 = pneg %p133
      %p140 = scmp.eq.s32.totalorder %s21, 1
      %p141 = por %p139, %p140
      %p142 = scmp.ne.s32.totalorder %s134, %s137
      %p143 = scmp.eq.s32.totalorder %s21, 0
      %p144 = por %p142, %p143
      %p145 = scmp.ne.s32.totalorder %s134, %s137
      %p146 = scmp.eq.s32.totalorder %s26, 1
      %p147 = por %p145, %p146
      %p148 = scmp.ne.s32.totalorder %s137, %s138
      %p149 = scmp.eq.s32.totalorder %s26, 0
      %p150 = por %p148, %p149
      %p151 = scmp.ne.s32.totalorder %s137, %s138
      %p152 = scmp.eq.s32.totalorder %s27, 1
      %p153 = por %p151, %p152
      %p155 = scmp.ne.s32.totalorder %s138, %s154
      %p156 = scmp.eq.s32.totalorder %s27, 0
      %p157 = por %p155, %p156
      %s158 = ssub.s32 %s28, %s40
      %p159 = scmp.eq.s32.totalorder %s158, 0
      %s161 = sadd.s32 %s160, 1
      %s162 = scalar_select %p159, %s160, %s161
      %p165 = pneg %p159
      %p166 = scmp.eq.s32.totalorder %s21, 1
      %p167 = por %p165, %p166
      %p168 = scmp.ne.s32.totalorder %s160, %s163
      %p169 = scmp.eq.s32.totalorder %s21, 0
      %p170 = por %p168, %p169
      %p171 = scmp.ne.s32.totalorder %s160, %s163
      %p172 = scmp.eq.s32.totalorder %s26, 1
      %p173 = por %p171, %p172
      %p174 = scmp.ne.s32.totalorder %s163, %s164
      %p175 = scmp.eq.s32.totalorder %s26, 0
      %p176 = por %p174, %p175
      %p177 = scmp.ne.s32.totalorder %s163, %s164
      %p178 = scmp.eq.s32.totalorder %s27, 1
      %p179 = por %p177, %p178
      %p181 = scmp.ne.s32.totalorder %s164, %s180
      %p182 = scmp.eq.s32.totalorder %s27, 0
      %p183 = por %p181, %p182
      %s184 = ssub.s32 %s28, %s40
      %p185 = scmp.eq.s32.totalorder %s184, 0
      %s187 = sadd.s32 %s186, 1
      %s188 = scalar_select %p185, %s186, %s187
      %p191 = pneg %p185
      %p192 = scmp.eq.s32.totalorder %s21, 1
      %p193 = por %p191, %p192
      %p194 = scmp.ne.s32.totalorder %s186, %s189
      %p195 = scmp.eq.s32.totalorder %s21, 0
      %p196 = por %p194, %p195
      %p197 = scmp.ne.s32.totalorder %s186, %s189
      %p198 = scmp.eq.s32.totalorder %s26, 1
      %p199 = por %p197, %p198
      %p200 = scmp.ne.s32.totalorder %s189, %s190
      %p201 = scmp.eq.s32.totalorder %s26, 0
      %p202 = por %p200, %p201
      %p203 = scmp.ne.s32.totalorder %s189, %s190
      %p204 = scmp.eq.s32.totalorder %s27, 1
      %p205 = por %p203, %p204
      %p207 = scmp.ne.s32.totalorder %s190, %s206
      %p208 = scmp.eq.s32.totalorder %s27, 0
      %p209 = por %p207, %p208
      %s210 = ssub.s32 %s28, %s40
      %p211 = scmp.eq.s32.totalorder %s210, 0
      %s213 = sadd.s32 %s212, 1
      %s214 = scalar_select %p211, %s212, %s213
      %p217 = pneg %p211
      %p218 = scmp.eq.s32.totalorder %s21, 1
      %p219 = por %p217, %p218
      %p220 = scmp.ne.s32.totalorder %s212, %s215
      %p221 = scmp.eq.s32.totalorder %s21, 0
      %p222 = por %p220, %p221
      %p223 = scmp.ne.s32.totalorder %s212, %s215
      %p224 = scmp.eq.s32.totalorder %s26, 1
      %p225 = por %p223, %p224
      %p226 = scmp.ne.s32.totalorder %s215, %s216
      %p227 = scmp.eq.s32.totalorder %s26, 0
      %p228 = por %p226, %p227
      %p229 = scmp.ne.s32.totalorder %s215, %s216
      %p230 = scmp.eq.s32.totalorder %s27, 1
      %p231 = por %p229, %p230
      %p233 = scmp.ne.s32.totalorder %s216, %s232
      %p234 = scmp.eq.s32.totalorder %s27, 0
      %p235 = por %p233, %p234
      %s236 = ssub.s32 %s28, %s40
      %p237 = scmp.eq.s32.totalorder %s236, 0
      %s239 = sadd.s32 %s238, 1
      %s240 = scalar_select %p237, %s238, %s239
      %p243 = pneg %p237
      %p244 = scmp.eq.s32.totalorder %s21, 1
      %p245 = por %p243, %p244
      %p246 = scmp.ne.s32.totalorder %s238, %s241
      %p247 = scmp.eq.s32.totalorder %s21, 0
      %p248 = por %p246, %p247
      %p249 = scmp.ne.s32.totalorder %s238, %s241
      %p250 = scmp.eq.s32.totalorder %s26, 1
      %p251 = por %p249, %p250
      %p252 = scmp.ne.s32.totalorder %s241, %s242
      %p253 = scmp.eq.s32.totalorder %s26, 0
      %p254 = por %p252, %p253
      %p255 = scmp.ne.s32.totalorder %s241, %s242
      %p256 = scmp.eq.s32.totalorder %s27, 1
      %p257 = por %p255, %p256
      %p259 = scmp.ne.s32.totalorder %s242, %s258
      %p260 = scmp.eq.s32.totalorder %s27, 0
      %p261 = por %p259, %p260
      %s263 = sadd.s32 %s262, 1
      %p266 = scmp.eq.s32.totalorder %s21, 1
      %p267 = scmp.ne.s32.totalorder %s262, %s264
      %p268 = scmp.eq.s32.totalorder %s21, 0
      %p269 = por %p267, %p268
      %p270 = scmp.ne.s32.totalorder %s262, %s264
      %p271 = scmp.eq.s32.totalorder %s26, 1
      %p272 = por %p270, %p271
      %p273 = scmp.ne.s32.totalorder %s264, %s265
      %p274 = scmp.eq.s32.totalorder %s26, 0
      %p275 = por %p273, %p274
      %p276 = scmp.ne.s32.totalorder %s264, %s265
      %p277 = scmp.eq.s32.totalorder %s27, 1
      %p278 = por %p276, %p277
      %p280 = scmp.ne.s32.totalorder %s265, %s279
      %p281 = scmp.eq.s32.totalorder %s27, 0
      %p282 = por %p280, %p281
      %s284 = sadd.s32 %s283, 1
      %p287 = scmp.eq.s32.totalorder %s21, 1
      %p288 = scmp.ne.s32.totalorder %s283, %s285
      %p289 = scmp.eq.s32.totalorder %s21, 0
      %p290 = por %p288, %p289
      %p291 = scmp.ne.s32.totalorder %s283, %s285
      %p292 = scmp.eq.s32.totalorder %s26, 1
      %p293 = por %p291, %p292
      %p294 = scmp.ne.s32.totalorder %s285, %s286
      %p295 = scmp.eq.s32.totalorder %s26, 0
      %p296 = por %p294, %p295
      %p297 = scmp.ne.s32.totalorder %s285, %s286
      %p298 = scmp.eq.s32.totalorder %s27, 1
      %p299 = por %p297, %p298
      %p301 = scmp.ne.s32.totalorder %s286, %s300
      %p302 = scmp.eq.s32.totalorder %s27, 0
      %p303 = por %p301, %p302
      %s305 = sadd.s32 %s304, 1
      %p308 = scmp.eq.s32.totalorder %s21, 1
      %p309 = scmp.ne.s32.totalorder %s304, %s306
      %p310 = scmp.eq.s32.totalorder %s21, 0
      %p311 = por %p309, %p310
      %p312 = scmp.ne.s32.totalorder %s304, %s306
      %p313 = scmp.eq.s32.totalorder %s26, 1
      %p314 = por %p312, %p313
      %p315 = scmp.ne.s32.totalorder %s306, %s307
      %p316 = scmp.eq.s32.totalorder %s26, 0
      %p317 = por %p315, %p316
      %p318 = scmp.ne.s32.totalorder %s306, %s307
      %p319 = scmp.eq.s32.totalorder %s27, 1
      %p320 = por %p318, %p319
      %p322 = scmp.ne.s32.totalorder %s307, %s321
      %p323 = scmp.eq.s32.totalorder %s27, 0
      %p324 = por %p322, %p323
      %p325 = scmp.le.s32.totalorder 1, %s21
      %p326 = scmp.lt.s32.totalorder %s21, 3
      %p327 = pnand %p325, %p326
      %p328 = pneg %p327
      // Predicated region
      $region9: #{tpu_custom_call.1} parent=5 // pred_check
        _
      $region10: #{tpu_custom_call.1} parent=5 // pred_check_branch
        %330 = sbr.rel (%p327) target = $region12
      $region11: #{tpu_custom_call.1} parent=5 // pred_region
        %s331 = ssub.s32 %s21, 1
        // Predicated region
        $region13: #{tpu_custom_call.1} parent=11 // pred_check
          %p332 = pneg %p54
        $region14: #{tpu_custom_call.1} parent=11 // pred_check_branch
          %334 = sbr.rel (%p332) target = $region16
        $region15: #{tpu_custom_call.1} parent=11 // pred_region
          %336 = vsyncadd [#allocation7], 0
          %s337 = sshll.u32 %s1, 4
          %s338 = int_to_ptr.hbm [resolvable:$true] %s337
          %s339 = sshll.u32 [#allocation6], 4
          %s340 = int_to_ptr.vmem [resolvable:$true] %s339
          %345 = dma.hbm_to_vmem [thread:$0]  %s338, 1024, %s340, [#allocation7], 64, 64, 4
        $region16: #{tpu_custom_call.1} parent=11 // pred_fallthru
          _
        // Predicated region
        $region17: #{tpu_custom_call.1} parent=11 // pred_check
          %p346 = pneg %p75
        $region18: #{tpu_custom_call.1} parent=11 // pred_check_branch
          %348 = sbr.rel (%p346) target = $region20
        $region19: #{tpu_custom_call.1} parent=11 // pred_region
          %350 = vsyncadd [#allocation10], 0
          %s351 = sshll.u32 %s2, 4
          %s352 = int_to_ptr.hbm [resolvable:$true] %s351
          %s353 = sshll.u32 [#allocation9], 4
          %s354 = int_to_ptr.vmem [resolvable:$true] %s353
          %359 = dma.hbm_to_vmem [thread:$0]  %s352, 1024, %s354, [#allocation10], 64, 64, 4
        $region20: #{tpu_custom_call.1} parent=11 // pred_fallthru
          _
        // Predicated region
        $region21: #{tpu_custom_call.1} parent=11 // pred_check
          %p360 = pneg %p124
        $region22: #{tpu_custom_call.1} parent=11 // pred_check_branch
          %362 = sbr.rel (%p360) target = $region24
        $region23: #{tpu_custom_call.1} parent=11 // pred_region
          _
        $region24: #{tpu_custom_call.1} parent=11 // pred_fallthru
          _
        // Predicated region
        $region25: #{tpu_custom_call.1} parent=11 // pred_check
          %p363 = pneg %p275
        $region26: #{tpu_custom_call.1} parent=11 // pred_check_branch
          %365 = sbr.rel (%p363) target = $region28
        $region27: #{tpu_custom_call.1} parent=11 // pred_region
          %367 = vsyncadd [#allocation10], 0
          %s368 = sshll.u32 %s10, 4
          %s369 = int_to_ptr.hbm [resolvable:$true] %s368
          %s370 = sshll.u32 [#allocation12], 4
          %s371 = int_to_ptr.vmem [resolvable:$true] %s370
          %376 = dma.hbm_to_vmem [thread:$0]  %s369, 1024, %s371, [#allocation10], 64, 64, 4
        $region28: #{tpu_custom_call.1} parent=11 // pred_fallthru
          _
        // Predicated region
        $region29: #{tpu_custom_call.1} parent=11 // pred_check
          %p377 = pneg %p296
        $region30: #{tpu_custom_call.1} parent=11 // pred_check_branch
          %379 = sbr.rel (%p377) target = $region32
        $region31: #{tpu_custom_call.1} parent=11 // pred_region
          _
        $region32: #{tpu_custom_call.1} parent=11 // pred_fallthru
          _
      $region12: #{tpu_custom_call.1} parent=5 // pred_fallthru
        _
      %p380 = scmp.lt.s32.totalorder %s21, 2
      // Predicated region
      $region33: #{tpu_custom_call.1} parent=5 // pred_check
        %p381 = pneg %p380
      $region34: #{tpu_custom_call.1} parent=5 // pred_check_branch
        %383 = sbr.rel (%p381) target = $region36
      $region35: #{tpu_custom_call.1} parent=5 // pred_region
        // Predicated region
        $region37: #{tpu_custom_call.1} parent=35 // pred_check
          %p384 = pneg %p97
        $region38: #{tpu_custom_call.1} parent=35 // pred_check_branch
          %386 = sbr.rel (%p384) target = $region40
        $region39: #{tpu_custom_call.1} parent=35 // pred_region
          %s387 = smul.u32 16, %s29
          %p388 = scmp.lt.s32.totalorder %s28, 1
          %s389 = scalar_select %p388, %s28, 1
          %p390 = scmp.lt.s32.totalorder %s387, 15
          %s391 = scalar_select %p390, %s387, 15
          %s392 = smul.addr %s389, 16
          %s393 = sadd.s32 %s391, %s392
          %s394 = smul.addr %s393, 8
          %s395 = scalar_lea.vmem %s3, %s394
          %s396 = smul.u32 16, %s29
        $region40: #{tpu_custom_call.1} parent=35 // pred_fallthru
          _
        // Predicated region
        $region41: #{tpu_custom_call.1} parent=35 // pred_check
          %p397 = pneg %p144
        $region42: #{tpu_custom_call.1} parent=35 // pred_check_branch
          %399 = sbr.rel (%p397) target = $region44
        $region43: #{tpu_custom_call.1} parent=35 // pred_region
          %p400 = scmp.lt.s32.totalorder %s28, 1
          %s401 = scalar_select %p400, %s28, 1
          %s402 = smul.addr %s401, 32
          %s403 = smul.addr %s402, 4
          %s404 = scalar_lea.vmem %s5, %s403
        $region44: #{tpu_custom_call.1} parent=35 // pred_fallthru
          _
        // Predicated region
        $region45: #{tpu_custom_call.1} parent=35 // pred_check
          %p405 = pneg %p170
        $region46: #{tpu_custom_call.1} parent=35 // pred_check_branch
          %407 = sbr.rel (%p405) target = $region48
        $region47: #{tpu_custom_call.1} parent=35 // pred_region
          %p408 = scmp.lt.s32.totalorder %s28, 1
          %s409 = scalar_select %p408, %s28, 1
          %s410 = smul.addr %s409, 2
          %s411 = scalar_lea.vmem %s6, %s410
        $region48: #{tpu_custom_call.1} parent=35 // pred_fallthru
          _
        // Predicated region
        $region49: #{tpu_custom_call.1} parent=35 // pred_check
          %p412 = pneg %p196
        $region50: #{tpu_custom_call.1} parent=35 // pred_check_branch
          %414 = sbr.rel (%p412) target = $region52
        $region51: #{tpu_custom_call.1} parent=35 // pred_region
          %p415 = scmp.lt.s32.totalorder %s28, 1
          %s416 = scalar_select %p415, %s28, 1
          %s417 = scalar_lea.vmem %s7, %s416
        $region52: #{tpu_custom_call.1} parent=35 // pred_fallthru
          _
        // Predicated region
        $region53: #{tpu_custom_call.1} parent=35 // pred_check
          %p418 = pneg %p222
        $region54: #{tpu_custom_call.1} parent=35 // pred_check_branch
          %420 = sbr.rel (%p418) target = $region56
        $region55: #{tpu_custom_call.1} parent=35 // pred_region
          %p421 = scmp.lt.s32.totalorder %s28, 1
          %s422 = scalar_select %p421, %s28, 1
          %s423 = scalar_lea.vmem %s8, %s422
        $region56: #{tpu_custom_call.1} parent=35 // pred_fallthru
          _
        // Predicated region
        $region57: #{tpu_custom_call.1} parent=35 // pred_check
          %p424 = pneg %p248
        $region58: #{tpu_custom_call.1} parent=35 // pred_check_branch
          %426 = sbr.rel (%p424) target = $region60
        $region59: #{tpu_custom_call.1} parent=35 // pred_region
          %s427 = sand.u32 %s21, 1
          %s428 = scalar_lea.sflag [#allocation7], %s427
          %s429 = sand.u32 %s238, 1
          %s430 = scalar_lea.vmem [#allocation11], %s429
          %432 = vsyncadd %s428, 0
          %s433 = scalar_lea.hbm %s9, %s28
          %s435 = sshll.u32 %s433, 4
          %s436 = int_to_ptr.hbm [resolvable:$true] %s435
          %s437 = sshll.u32 %s430, 4
          %s438 = int_to_ptr.vmem [resolvable:$true] %s437
          %440 = dma.hbm_to_vmem [thread:$0]  %s436, 16, %s438, %s428
        $region60: #{tpu_custom_call.1} parent=35 // pred_fallthru
          _
      $region36: #{tpu_custom_call.1} parent=5 // pred_fallthru
        _
      %p441 = scmp.le.s32.totalorder 1, %s21
      %p442 = scmp.lt.s32.totalorder %s21, 3
      %p443 = pnand %p441, %p442
      %p444 = pneg %p443
      // Predicated region
      $region61: #{tpu_custom_call.1} parent=5 // pred_check
        _
      $region62: #{tpu_custom_call.1} parent=5 // pred_check_branch
        %446 = sbr.rel (%p443) target = $region64
      $region63: #{tpu_custom_call.1} parent=5 // pred_region
        %s447 = ssub.s32 %s21, 1
        // Predicated region
        $region65: #{tpu_custom_call.1} parent=63 // pred_check
          %p448 = pneg %p54
        $region66: #{tpu_custom_call.1} parent=63 // pred_check_branch
          %450 = sbr.rel (%p448) target = $region68
        $region67: #{tpu_custom_call.1} parent=63 // pred_region
          %452 = dma.done [#allocation7], 1024
        $region68: #{tpu_custom_call.1} parent=63 // pred_fallthru
          _
        // Predicated region
        $region69: #{tpu_custom_call.1} parent=63 // pred_check
          %p453 = pneg %p75
        $region70: #{tpu_custom_call.1} parent=63 // pred_check_branch
          %455 = sbr.rel (%p453) target = $region72
        $region71: #{tpu_custom_call.1} parent=63 // pred_region
          %457 = dma.done [#allocation10], 1024
        $region72: #{tpu_custom_call.1} parent=63 // pred_fallthru
          _
        %s458 = sand.u32 %s26, 1
        %s459 = scalar_lea.sflag [#allocation7], %s458
        %s460 = sand.u32 %s241, 1
        %s461 = scalar_lea.vmem [#allocation11], %s460
        // Predicated region
        $region73: #{tpu_custom_call.1} parent=63 // pred_check
          %p462 = pneg %p254
        $region74: #{tpu_custom_call.1} parent=63 // pred_check_branch
          %464 = sbr.rel (%p462) target = $region76
        $region75: #{tpu_custom_call.1} parent=63 // pred_region
          %466 = dma.done %s459, 16
        $region76: #{tpu_custom_call.1} parent=63 // pred_fallthru
          _
        // Predicated region
        $region77: #{tpu_custom_call.1} parent=63 // pred_check
          %p467 = pneg %p275
        $region78: #{tpu_custom_call.1} parent=63 // pred_check_branch
          %469 = sbr.rel (%p467) target = $region80
        $region79: #{tpu_custom_call.1} parent=63 // pred_region
          %471 = dma.done [#allocation10], 1024
        $region80: #{tpu_custom_call.1} parent=63 // pred_fallthru
          _
        %p472 = pneg %p54
        %p473 = pneg %p51
        %p474 = pneg %p75
        %p475 = pneg %p72
        %s476 = smul.u32 16, %s31
        %p477 = scmp.lt.s32.totalorder %s30, 1
        %s478 = scalar_select %p477, %s30, 1
        %p479 = scmp.lt.s32.totalorder %s476, 15
        %s480 = scalar_select %p479, %s476, 15
        %s481 = smul.addr %s478, 16
        %s482 = sadd.s32 %s480, %s481
        %s483 = smul.addr %s482, 8
        %s484 = scalar_lea.vmem %s3, %s483
        %p485 = pneg %p103
        %p486 = pneg %p100
        %p487 = pneg %p124
        %p488 = pneg %p121
        %p489 = scmp.lt.s32.totalorder %s30, 1
        %s490 = scalar_select %p489, %s30, 1
        %s491 = smul.addr %s490, 32
        %s492 = smul.addr %s491, 4
        %s493 = scalar_lea.vmem %s5, %s492
        %p494 = pneg %p150
        %p495 = pneg %p147
        %p496 = scmp.lt.s32.totalorder %s30, 1
        %s497 = scalar_select %p496, %s30, 1
        %s498 = smul.addr %s497, 2
        %s499 = scalar_lea.vmem %s6, %s498
        %p500 = pneg %p176
        %p501 = pneg %p173
        %p502 = scmp.lt.s32.totalorder %s30, 1
        %s503 = scalar_select %p502, %s30, 1
        %s504 = scalar_lea.vmem %s7, %s503
        %p505 = pneg %p202
        %p506 = pneg %p199
        %p507 = scmp.lt.s32.totalorder %s30, 1
        %s508 = scalar_select %p507, %s30, 1
        %s509 = scalar_lea.vmem %s8, %s508
        %p510 = pneg %p228
        %p511 = pneg %p225
        %s512 = sand.u32 %s26, 1
        %s513 = scalar_lea.sflag [#allocation7], %s512
        %s514 = sand.u32 %s241, 1
        %s515 = scalar_lea.vmem [#allocation11], %s514
        %p516 = pneg %p254
        %p517 = pneg %p251
        %p518 = pneg %p275
        %p519 = pneg %p272
        %p520 = pneg %p296
        %p521 = pneg %p293
        %p522 = pneg %p317
        %p523 = pneg %p314
        %s524 = smul.u32 16, %s31
        %p525 = scmp.lt.s32.totalorder %s30, 1
        %s526 = scalar_select %p525, %s30, 1
        %p527 = scmp.lt.s32.totalorder %s524, 15
        %s528 = scalar_select %p527, %s524, 15
        %s529 = smul.addr %s526, 16
        %s530 = sadd.s32 %s528, %s529
        %s531 = smul.addr %s530, 8
        %s532 = scalar_lea.vmem %s3, %s531
        %s533 = smul.u32 16, %s31
        %p534 = scmp.lt.s32.totalorder %s30, 1
        %s535 = scalar_select %p534, %s30, 1
        %s536 = smul.addr %s535, 32
        %s537 = smul.addr %s536, 4
        %s538 = scalar_lea.vmem %s5, %s537
        %p539 = scmp.lt.s32.totalorder %s30, 1
        %s540 = scalar_select %p539, %s30, 1
        %s541 = smul.addr %s540, 2
        %s542 = scalar_lea.vmem %s6, %s541
        %p543 = scmp.lt.s32.totalorder %s30, 1
        %s544 = scalar_select %p543, %s30, 1
        %s545 = scalar_lea.vmem %s7, %s544
        %p546 = scmp.lt.s32.totalorder %s30, 1
        %s547 = scalar_select %p546, %s30, 1
        %s548 = scalar_lea.vmem %s8, %s547
        %p549 = scmp.eq.s32.totalorder %s30, 0
        %p550 = scmp.eq.s32.totalorder %s31, 0
        %p551 = pnand %p549, %p550
        %p552 = pneg %p551
        // Predicated region
        $region81: #{tpu_custom_call.1} parent=63 // pred_check
          _
        $region82: #{tpu_custom_call.1} parent=63 // pred_check_branch
          %554 = sbr.rel (%p551) target = $region84
        $region83: #{tpu_custom_call.1} parent=63 // pred_region
          // Predicated region
          $region85: #{tpu_custom_call.1} parent=83 // pred_check
            _
          $region86: #{tpu_custom_call.1} parent=83 // pred_check_branch
            %556 = sbr.rel (0) target = $region88
          $region87: #{tpu_custom_call.1} parent=83 // pred_region
            loop: start=0, step=1, limit=1
            $region89: #{tpu_custom_call.1} parent=87 // loop_pre_header
              _
            $region90: #{tpu_custom_call.1} parent=87 // loop_header
              %s558 = sphi 0, %s562
              %p559 = scmp.ge.s32.totalorder %s558, 1
              %s563 = sphi %s0, %s0
              %s564 = sphi [#allocation2], [#allocation2]
            $region91: #{tpu_custom_call.1} parent=87 // loop_header_branch
              %561 = sbr.rel (%p559) target = $region95
            $region92: #{tpu_custom_call.1} parent=87 // loop_body
              %v565 = vld [vmem:[%s563] sm:$0xff]
              %566 = vst [vmem:[%s564] sm:$0xff] %v565
              %v567 = vld [vmem:[%s563 + $0x8] sm:$0xff]
              %568 = vst [vmem:[%s564 + $0x8] sm:$0xff] %v567
              %v569 = vld [vmem:[%s563 + $0x10] sm:$0xff]
              %570 = vst [vmem:[%s564 + $0x10] sm:$0xff] %v569
              %v571 = vld [vmem:[%s563 + $0x18] sm:$0xff]
              %572 = vst [vmem:[%s564 + $0x18] sm:$0xff] %v571
              %v573 = vld [vmem:[%s563 + $0x20] sm:$0xff]
              %574 = vst [vmem:[%s564 + $0x20] sm:$0xff] %v573
              %v575 = vld [vmem:[%s563 + $0x28] sm:$0xff]
              %576 = vst [vmem:[%s564 + $0x28] sm:$0xff] %v575
              %v577 = vld [vmem:[%s563 + $0x30] sm:$0xff]
              %578 = vst [vmem:[%s564 + $0x30] sm:$0xff] %v577
              %v579 = vld [vmem:[%s563 + $0x38] sm:$0xff]
              %580 = vst [vmem:[%s564 + $0x38] sm:$0xff] %v579
              %v581 = vld [vmem:[%s563 + $0x40] sm:$0xff]
              %582 = vst [vmem:[%s564 + $0x40] sm:$0xff] %v581
              %v583 = vld [vmem:[%s563 + $0x48] sm:$0xff]
              %584 = vst [vmem:[%s564 + $0x48] sm:$0xff] %v583
              %v585 = vld [vmem:[%s563 + $0x50] sm:$0xff]
              %586 = vst [vmem:[%s564 + $0x50] sm:$0xff] %v585
              %v587 = vld [vmem:[%s563 + $0x58] sm:$0xff]
              %588 = vst [vmem:[%s564 + $0x58] sm:$0xff] %v587
              %v589 = vld [vmem:[%s563 + $0x60] sm:$0xff]
              %590 = vst [vmem:[%s564 + $0x60] sm:$0xff] %v589
              %v591 = vld [vmem:[%s563 + $0x68] sm:$0xff]
              %592 = vst [vmem:[%s564 + $0x68] sm:$0xff] %v591
              %v593 = vld [vmem:[%s563 + $0x70] sm:$0xff]
              %594 = vst [vmem:[%s564 + $0x70] sm:$0xff] %v593
              %v595 = vld [vmem:[%s563 + $0x78] sm:$0xff]
              %596 = vst [vmem:[%s564 + $0x78] sm:$0xff] %v595
            $region93: #{tpu_custom_call.1} parent=87 // loop_footer
              %s562 = sadd.s32 1, %s558
            $region94: #{tpu_custom_call.1} parent=87 // loop_footer_branch
              %557 = sbr.rel target = $region90
            $region95: #{tpu_custom_call.1} parent=87 // loop_exit
              _
          $region88: #{tpu_custom_call.1} parent=83 // pred_fallthru
            _
          // Predicated region
          $region96: #{tpu_custom_call.1} parent=83 // pred_check
            _
          $region97: #{tpu_custom_call.1} parent=83 // pred_check_branch
            %598 = sbr.rel target = $region99
          $region98: #{tpu_custom_call.1} parent=83 // pred_region
            _
          $region99: #{tpu_custom_call.1} parent=83 // pred_fallthru
            _
          // Predicated region
          $region100: #{tpu_custom_call.1} parent=83 // pred_check
            _
          $region101: #{tpu_custom_call.1} parent=83 // pred_check_branch
            %601 = sbr.rel (0) target = $region103
          $region102: #{tpu_custom_call.1} parent=83 // pred_region
            %602 = vsyncadd [#allocation5], 2048
          $region103: #{tpu_custom_call.1} parent=83 // pred_fallthru
            _
          %s603 = smul.u32 128, 1
          %s604 = sshll.u32 %s603, 4
          %605 = dma.done [#allocation5], %s604
        $region84: #{tpu_custom_call.1} parent=63 // pred_fallthru
          _
        // Predicated region
        $region104: #{tpu_custom_call.1} parent=63 // pred_check
          %p606 = pneg %p550
        $region105: #{tpu_custom_call.1} parent=63 // pred_check_branch
          %608 = sbr.rel (%p606) target = $region107
        $region106: #{tpu_custom_call.1} parent=63 // pred_region
          %v609 = vld [vmem:[#allocation2] sm:$0xff]
          %v610 = vld [vmem:[#allocation2 + $0x8] sm:$0xff]
          %v611 = vld [vmem:[#allocation2 + $0x10] sm:$0xff]
          %v612 = vld [vmem:[#allocation2 + $0x18] sm:$0xff]
          %v613 = vld [vmem:[#allocation2 + $0x20] sm:$0xff]
          %v614 = vld [vmem:[#allocation2 + $0x28] sm:$0xff]
          %v615 = vld [vmem:[#allocation2 + $0x30] sm:$0xff]
          %v616 = vld [vmem:[#allocation2 + $0x38] sm:$0xff]
          %v617 = vld [vmem:[#allocation2 + $0x40] sm:$0xff]
          %v618 = vld [vmem:[#allocation2 + $0x48] sm:$0xff]
          %v619 = vld [vmem:[#allocation2 + $0x50] sm:$0xff]
          %v620 = vld [vmem:[#allocation2 + $0x58] sm:$0xff]
          %v621 = vld [vmem:[#allocation2 + $0x60] sm:$0xff]
          %v622 = vld [vmem:[#allocation2 + $0x68] sm:$0xff]
          %v623 = vld [vmem:[#allocation2 + $0x70] sm:$0xff]
          %v624 = vld [vmem:[#allocation2 + $0x78] sm:$0xff]
          %v625 = vpack.c.bf16 %v609, %v609
          %v626 = vpack.c.bf16 %v610, %v610
          %v627 = vpack.c.bf16 %v611, %v611
          %v628 = vpack.c.bf16 %v612, %v612
          %v629 = vpack.c.bf16 %v613, %v613
          %v630 = vpack.c.bf16 %v614, %v614
          %v631 = vpack.c.bf16 %v615, %v615
          %v632 = vpack.c.bf16 %v616, %v616
          %v633 = vpack.c.bf16 %v617, %v617
          %v634 = vpack.c.bf16 %v618, %v618
          %v635 = vpack.c.bf16 %v619, %v619
          %v636 = vpack.c.bf16 %v620, %v620
          %v637 = vpack.c.bf16 %v621, %v621
          %v638 = vpack.c.bf16 %v622, %v622
          %v639 = vpack.c.bf16 %v623, %v623
          %v640 = vpack.c.bf16 %v624, %v624
          %641 = vst [vmem:[#allocation3] sm:$0xf] %v625
          %642 = vst [vmem:[#allocation3 + $0x4] sm:$0xf] %v626
          %643 = vst [vmem:[#allocation3 + $0x8] sm:$0xf] %v627
          %644 = vst [vmem:[#allocation3 + $0xc] sm:$0xf] %v628
          %645 = vst [vmem:[#allocation3 + $0x10] sm:$0xf] %v629
          %646 = vst [vmem:[#allocation3 + $0x14] sm:$0xf] %v630
          %647 = vst [vmem:[#allocation3 + $0x18] sm:$0xf] %v631
          %648 = vst [vmem:[#allocation3 + $0x1c] sm:$0xf] %v632
          %649 = vst [vmem:[#allocation3 + $0x20] sm:$0xf] %v633
          %650 = vst [vmem:[#allocation3 + $0x24] sm:$0xf] %v634
          %651 = vst [vmem:[#allocation3 + $0x28] sm:$0xf] %v635
          %652 = vst [vmem:[#allocation3 + $0x2c] sm:$0xf] %v636
          %653 = vst [vmem:[#allocation3 + $0x30] sm:$0xf] %v637
          %654 = vst [vmem:[#allocation3 + $0x34] sm:$0xf] %v638
          %655 = vst [vmem:[#allocation3 + $0x38] sm:$0xf] %v639
          %656 = vst [vmem:[#allocation3 + $0x3c] sm:$0xf] %v640
        $region107: #{tpu_custom_call.1} parent=63 // pred_fallthru
          _
        %s657 = smul.u32 %s31, 16
        %s658 = smul.addr %s657, 4
        %s659 = scalar_lea.vmem [#allocation6], %s658
        %v660 = vld [vmem:[%s659] sm:$0xf]
        %v661 = vld [vmem:[%s659 + $0x4] sm:$0xf]
        %v662 = vld [vmem:[%s659 + $0x8] sm:$0xf]
        %v663 = vld [vmem:[%s659 + $0xc] sm:$0xf]
        %v664 = vld [vmem:[%s659 + $0x10] sm:$0xf]
        %v665 = vld [vmem:[%s659 + $0x14] sm:$0xf]
        %v666 = vld [vmem:[%s659 + $0x18] sm:$0xf]
        %v667 = vld [vmem:[%s659 + $0x1c] sm:$0xf]
        %v668 = vld [vmem:[%s659 + $0x20] sm:$0xf]
        %v669 = vld [vmem:[%s659 + $0x24] sm:$0xf]
        %v670 = vld [vmem:[%s659 + $0x28] sm:$0xf]
        %v671 = vld [vmem:[%s659 + $0x2c] sm:$0xf]
        %v672 = vld [vmem:[%s659 + $0x30] sm:$0xf]
        %v673 = vld [vmem:[%s659 + $0x34] sm:$0xf]
        %v674 = vld [vmem:[%s659 + $0x38] sm:$0xf]
        %v675 = vld [vmem:[%s659 + $0x3c] sm:$0xf]
        %s676 = smul.addr %s657, 4
        %s677 = scalar_lea.vmem [#allocation9], %s676
        %v678 = vld [vmem:[%s677] sm:$0xf]
        %v679 = vld [vmem:[%s677 + $0x4] sm:$0xf]
        %v680 = vld [vmem:[%s677 + $0x8] sm:$0xf]
        %v681 = vld [vmem:[%s677 + $0xc] sm:$0xf]
        %v682 = vld [vmem:[%s677 + $0x10] sm:$0xf]
        %v683 = vld [vmem:[%s677 + $0x14] sm:$0xf]
        %v684 = vld [vmem:[%s677 + $0x18] sm:$0xf]
        %v685 = vld [vmem:[%s677 + $0x1c] sm:$0xf]
        %v686 = vld [vmem:[%s677 + $0x20] sm:$0xf]
        %v687 = vld [vmem:[%s677 + $0x24] sm:$0xf]
        %v688 = vld [vmem:[%s677 + $0x28] sm:$0xf]
        %v689 = vld [vmem:[%s677 + $0x2c] sm:$0xf]
        %v690 = vld [vmem:[%s677 + $0x30] sm:$0xf]
        %v691 = vld [vmem:[%s677 + $0x34] sm:$0xf]
        %v692 = vld [vmem:[%s677 + $0x38] sm:$0xf]
        %v693 = vld [vmem:[%s677 + $0x3c] sm:$0xf]
        %v694 = vld [vmem:[#allocation3] sm:$0xf]
        %v695 = vld [vmem:[#allocation3 + $0x4] sm:$0xf]
        %v696 = vld [vmem:[#allocation3 + $0x8] sm:$0xf]
        %v697 = vld [vmem:[#allocation3 + $0xc] sm:$0xf]
        %v698 = vld [vmem:[#allocation3 + $0x10] sm:$0xf]
        %v699 = vld [vmem:[#allocation3 + $0x14] sm:$0xf]
        %v700 = vld [vmem:[#allocation3 + $0x18] sm:$0xf]
        %v701 = vld [vmem:[#allocation3 + $0x1c] sm:$0xf]
        %v702 = vld [vmem:[#allocation3 + $0x20] sm:$0xf]
        %v703 = vld [vmem:[#allocation3 + $0x24] sm:$0xf]
        %v704 = vld [vmem:[#allocation3 + $0x28] sm:$0xf]
        %v705 = vld [vmem:[#allocation3 + $0x2c] sm:$0xf]
        %v706 = vld [vmem:[#allocation3 + $0x30] sm:$0xf]
        %v707 = vld [vmem:[#allocation3 + $0x34] sm:$0xf]
        %v708 = vld [vmem:[#allocation3 + $0x38] sm:$0xf]
        %v709 = vld [vmem:[#allocation3 + $0x3c] sm:$0xf]
        %v726 = vunpack.c.l.b16 %v660
        %v727 = vunpack.c.l.b16 %v661
        %v728 = vunpack.c.l.b16 %v662
        %v729 = vunpack.c.l.b16 %v663
        %v730 = vunpack.c.l.b16 %v664
        %v731 = vunpack.c.l.b16 %v665
        %v732 = vunpack.c.l.b16 %v666
        %v733 = vunpack.c.l.b16 %v667
        %v734 = vunpack.c.l.b16 %v668
        %v735 = vunpack.c.l.b16 %v669
        %v736 = vunpack.c.l.b16 %v670
        %v737 = vunpack.c.l.b16 %v671
        %v738 = vunpack.c.l.b16 %v672
        %v739 = vunpack.c.l.b16 %v673
        %v740 = vunpack.c.l.b16 %v674
        %v741 = vunpack.c.l.b16 %v675
        %v742 = vpack.c.b16 %v727, %v726
        %v743 = vpack.c.b16 %v729, %v728
        %v744 = vpack.c.b16 %v731, %v730
        %v745 = vpack.c.b16 %v733, %v732
        %v746 = vpack.c.b16 %v735, %v734
        %v747 = vpack.c.b16 %v737, %v736
        %v748 = vpack.c.b16 %v739, %v738
        %v749 = vpack.c.b16 %v741, %v740
        %v774 = vunpack.c.l.b16 %v694
        %v775 = vunpack.c.l.b16 %v695
        %v776 = vunpack.c.l.b16 %v696
        %v777 = vunpack.c.l.b16 %v697
        %v778 = vunpack.c.l.b16 %v698
        %v779 = vunpack.c.l.b16 %v699
        %v780 = vunpack.c.l.b16 %v700
        %v781 = vunpack.c.l.b16 %v701
        %v782 = vunpack.c.l.b16 %v702
        %v783 = vunpack.c.l.b16 %v703
        %v784 = vunpack.c.l.b16 %v704
        %v785 = vunpack.c.l.b16 %v705
        %v786 = vunpack.c.l.b16 %v706
        %v787 = vunpack.c.l.b16 %v707
        %v788 = vunpack.c.l.b16 %v708
        %v789 = vunpack.c.l.b16 %v709
        %v790 = vpack.c.b16 %v775, %v774
        %v791 = vpack.c.b16 %v777, %v776
        %v792 = vpack.c.b16 %v779, %v778
        %v793 = vpack.c.b16 %v781, %v780
        %v794 = vpack.c.b16 %v783, %v782
        %v795 = vpack.c.b16 %v785, %v784
        %v796 = vpack.c.b16 %v787, %v786
        %v797 = vpack.c.b16 %v789, %v788
        %806 = vmatpush.bf16.msra.mxu0 %v797
        %807 = vmatpush.bf16.msra.mxu0 %v796
        %808 = vmatpush.bf16.msra.mxu0 %v795
        %809 = vmatpush.bf16.msra.mxu0 %v794
        %810 = vmatpush.bf16.msra.mxu0 %v793
        %811 = vmatpush.bf16.msra.mxu0 %v792
        %812 = vmatpush.bf16.msra.mxu0 %v791
        %813 = vmatpush.bf16.msra.mxu0 %v790
        %814 = vmatmul.bf16.gmra.mxu0 %v742
        %v815 = vpop.f32.mrf.mxu0
        %v816 = vadd.f32 0.0, %v815
        %v817 = vpop.f32.mrf.mxu0
        %v818 = vadd.f32 0.0, %v817
        %819 = vmatmul.bf16.gmra.mxu0 %v743
        %v820 = vpop.f32.mrf.mxu0
        %v821 = vadd.f32 0.0, %v820
        %v822 = vpop.f32.mrf.mxu0
        %v823 = vadd.f32 0.0, %v822
        %824 = vmatmul.bf16.gmra.mxu0 %v744
        %v825 = vpop.f32.mrf.mxu0
        %v826 = vadd.f32 0.0, %v825
        %v827 = vpop.f32.mrf.mxu0
        %v828 = vadd.f32 0.0, %v827
        %829 = vmatmul.bf16.gmra.mxu0 %v745
        %v830 = vpop.f32.mrf.mxu0
        %v831 = vadd.f32 0.0, %v830
        %v832 = vpop.f32.mrf.mxu0
        %v833 = vadd.f32 0.0, %v832
        %834 = vmatmul.bf16.gmra.mxu0 %v746
        %v835 = vpop.f32.mrf.mxu0
        %v836 = vadd.f32 0.0, %v835
        %v837 = vpop.f32.mrf.mxu0
        %v838 = vadd.f32 0.0, %v837
        %839 = vmatmul.bf16.gmra.mxu0 %v747
        %v840 = vpop.f32.mrf.mxu0
        %v841 = vadd.f32 0.0, %v840
        %v842 = vpop.f32.mrf.mxu0
        %v843 = vadd.f32 0.0, %v842
        %844 = vmatmul.bf16.gmra.mxu0 %v748
        %v845 = vpop.f32.mrf.mxu0
        %v846 = vadd.f32 0.0, %v845
        %v847 = vpop.f32.mrf.mxu0
        %v848 = vadd.f32 0.0, %v847
        %849 = vmatmul.bf16.gmra.mxu0 %v749
        %v850 = vpop.f32.mrf.mxu0
        %v851 = vadd.f32 0.0, %v850
        %v852 = vpop.f32.mrf.mxu0
        %v853 = vadd.f32 0.0, %v852
        %854 = vdwg.mxu0
        %v855 = vld [vmem:[%s532] sm:$0xff]
        %v856 = vld [vmem:[%s532 + $0x8] sm:$0xff]
        %v857 = vld [vmem:[%s532 + $0x10] sm:$0xff]
        %v858 = vld [vmem:[%s532 + $0x18] sm:$0xff]
        %v859 = vld [vmem:[%s532 + $0x20] sm:$0xff]
        %v860 = vld [vmem:[%s532 + $0x28] sm:$0xff]
        %v861 = vld [vmem:[%s532 + $0x30] sm:$0xff]
        %v862 = vld [vmem:[%s532 + $0x38] sm:$0xff]
        %v863 = vld [vmem:[%s532 + $0x40] sm:$0xff]
        %v864 = vld [vmem:[%s532 + $0x48] sm:$0xff]
        %v865 = vld [vmem:[%s532 + $0x50] sm:$0xff]
        %v866 = vld [vmem:[%s532 + $0x58] sm:$0xff]
        %v867 = vld [vmem:[%s532 + $0x60] sm:$0xff]
        %v868 = vld [vmem:[%s532 + $0x68] sm:$0xff]
        %v869 = vld [vmem:[%s532 + $0x70] sm:$0xff]
        %v870 = vld [vmem:[%s532 + $0x78] sm:$0xff]
        %872 = vset.pattern.permute.xlu0 0
        %873 = vperm.xlu0 %872, %v855
        %v874 = vpop.permute.xlu0 %873
        %877 = vset.pattern.permute.xlu0 0
        %878 = vperm.xlu0 %877, %v856
        %v879 = vpop.permute.xlu0 %878
        %882 = vset.pattern.permute.xlu0 0
        %883 = vperm.xlu0 %882, %v857
        %v884 = vpop.permute.xlu0 %883
        %887 = vset.pattern.permute.xlu0 0
        %888 = vperm.xlu0 %887, %v858
        %v889 = vpop.permute.xlu0 %888
        %892 = vset.pattern.permute.xlu0 0
        %893 = vperm.xlu0 %892, %v859
        %v894 = vpop.permute.xlu0 %893
        %897 = vset.pattern.permute.xlu0 0
        %898 = vperm.xlu0 %897, %v860
        %v899 = vpop.permute.xlu0 %898
        %902 = vset.pattern.permute.xlu0 0
        %903 = vperm.xlu0 %902, %v861
        %v904 = vpop.permute.xlu0 %903
        %907 = vset.pattern.permute.xlu0 0
        %908 = vperm.xlu0 %907, %v862
        %v909 = vpop.permute.xlu0 %908
        %912 = vset.pattern.permute.xlu0 0
        %913 = vperm.xlu0 %912, %v863
        %v914 = vpop.permute.xlu0 %913
        %917 = vset.pattern.permute.xlu0 0
        %918 = vperm.xlu0 %917, %v864
        %v919 = vpop.permute.xlu0 %918
        %922 = vset.pattern.permute.xlu0 0
        %923 = vperm.xlu0 %922, %v865
        %v924 = vpop.permute.xlu0 %923
        %927 = vset.pattern.permute.xlu0 0
        %928 = vperm.xlu0 %927, %v866
        %v929 = vpop.permute.xlu0 %928
        %932 = vset.pattern.permute.xlu0 0
        %933 = vperm.xlu0 %932, %v867
        %v934 = vpop.permute.xlu0 %933
        %937 = vset.pattern.permute.xlu0 0
        %938 = vperm.xlu0 %937, %v868
        %v939 = vpop.permute.xlu0 %938
        %942 = vset.pattern.permute.xlu0 0
        %943 = vperm.xlu0 %942, %v869
        %v944 = vpop.permute.xlu0 %943
        %947 = vset.pattern.permute.xlu0 0
        %948 = vperm.xlu0 %947, %v870
        %v949 = vpop.permute.xlu0 %948
        %v951 = vmul.f32 %v874, %v816
        %v952 = vmul.f32 %v879, %v818
        %v953 = vmul.f32 %v884, %v821
        %v954 = vmul.f32 %v889, %v823
        %v955 = vmul.f32 %v894, %v826
        %v956 = vmul.f32 %v899, %v828
        %v957 = vmul.f32 %v904, %v831
        %v958 = vmul.f32 %v909, %v833
        %v959 = vmul.f32 %v914, %v836
        %v960 = vmul.f32 %v919, %v838
        %v961 = vmul.f32 %v924, %v841
        %v962 = vmul.f32 %v929, %v843
        %v963 = vmul.f32 %v934, %v846
        %v964 = vmul.f32 %v939, %v848
        %v965 = vmul.f32 %v944, %v851
        %v966 = vmul.f32 %v949, %v853
        %v967 = vpack.c.bf16 %v952, %v951
        %v968 = vpack.c.bf16 %v954, %v953
        %v969 = vpack.c.bf16 %v956, %v955
        %v970 = vpack.c.bf16 %v958, %v957
        %v971 = vpack.c.bf16 %v960, %v959
        %v972 = vpack.c.bf16 %v962, %v961
        %v973 = vpack.c.bf16 %v964, %v963
        %v974 = vpack.c.bf16 %v966, %v965
        %v991 = vunpack.c.l.b16 %v678
        %v992 = vunpack.c.l.b16 %v679
        %v993 = vunpack.c.l.b16 %v680
        %v994 = vunpack.c.l.b16 %v681
        %v995 = vunpack.c.l.b16 %v682
        %v996 = vunpack.c.l.b16 %v683
        %v997 = vunpack.c.l.b16 %v684
        %v998 = vunpack.c.l.b16 %v685
        %v999 = vunpack.c.l.b16 %v686
        %v1000 = vunpack.c.l.b16 %v687
        %v1001 = vunpack.c.l.b16 %v688
        %v1002 = vunpack.c.l.b16 %v689
        %v1003 = vunpack.c.l.b16 %v690
        %v1004 = vunpack.c.l.b16 %v691
        %v1005 = vunpack.c.l.b16 %v692
        %v1006 = vunpack.c.l.b16 %v693
        %v1007 = vpack.c.b16 %v992, %v991
        %v1008 = vpack.c.b16 %v994, %v993
        %v1009 = vpack.c.b16 %v996, %v995
        %v1010 = vpack.c.b16 %v998, %v997
        %v1011 = vpack.c.b16 %v1000, %v999
        %v1012 = vpack.c.b16 %v1002, %v1001
        %v1013 = vpack.c.b16 %v1004, %v1003
        %v1014 = vpack.c.b16 %v1006, %v1005
        %1023 = vmatpush.bf16.msra.mxu0 %v974
        %1024 = vmatpush.bf16.msra.mxu0 %v973
        %1025 = vmatpush.bf16.msra.mxu0 %v972
        %1026 = vmatpush.bf16.msra.mxu0 %v971
        %1027 = vmatpush.bf16.msra.mxu0 %v970
        %1028 = vmatpush.bf16.msra.mxu0 %v969
        %1029 = vmatpush.bf16.msra.mxu0 %v968
        %1030 = vmatpush.bf16.msra.mxu0 %v967
        %1031 = vmatmul.bf16.gmra.mxu0 %v1007
        %v1032 = vpop.f32.mrf.mxu0
        %v1033 = vadd.f32 0.0, %v1032
        %v1034 = vpop.f32.mrf.mxu0
        %v1035 = vadd.f32 0.0, %v1034
        %1036 = vmatmul.bf16.gmra.mxu0 %v1008
        %v1037 = vpop.f32.mrf.mxu0
        %v1038 = vadd.f32 0.0, %v1037
        %v1039 = vpop.f32.mrf.mxu0
        %v1040 = vadd.f32 0.0, %v1039
        %1041 = vmatmul.bf16.gmra.mxu0 %v1009
        %v1042 = vpop.f32.mrf.mxu0
        %v1043 = vadd.f32 0.0, %v1042
        %v1044 = vpop.f32.mrf.mxu0
        %v1045 = vadd.f32 0.0, %v1044
        %1046 = vmatmul.bf16.gmra.mxu0 %v1010
        %v1047 = vpop.f32.mrf.mxu0
        %v1048 = vadd.f32 0.0, %v1047
        %v1049 = vpop.f32.mrf.mxu0
        %v1050 = vadd.f32 0.0, %v1049
        %1051 = vmatmul.bf16.gmra.mxu0 %v1011
        %v1052 = vpop.f32.mrf.mxu0
        %v1053 = vadd.f32 0.0, %v1052
        %v1054 = vpop.f32.mrf.mxu0
        %v1055 = vadd.f32 0.0, %v1054
        %1056 = vmatmul.bf16.gmra.mxu0 %v1012
        %v1057 = vpop.f32.mrf.mxu0
        %v1058 = vadd.f32 0.0, %v1057
        %v1059 = vpop.f32.mrf.mxu0
        %v1060 = vadd.f32 0.0, %v1059
        %1061 = vmatmul.bf16.gmra.mxu0 %v1013
        %v1062 = vpop.f32.mrf.mxu0
        %v1063 = vadd.f32 0.0, %v1062
        %v1064 = vpop.f32.mrf.mxu0
        %v1065 = vadd.f32 0.0, %v1064
        %1066 = vmatmul.bf16.gmra.mxu0 %v1014
        %v1067 = vpop.f32.mrf.mxu0
        %v1068 = vadd.f32 0.0, %v1067
        %v1069 = vpop.f32.mrf.mxu0
        %v1070 = vadd.f32 0.0, %v1069
        %1071 = vdwg.mxu0
        // Predicated region
        $region108: #{tpu_custom_call.1} parent=63 // pred_check
          %p1072 = pneg %p550
        $region109: #{tpu_custom_call.1} parent=63 // pred_check_branch
          %1074 = sbr.rel (%p1072) target = $region111
        $region110: #{tpu_custom_call.1} parent=63 // pred_region
          %1075 = vst [vmem:[#allocation4] sm:$0xff] %v1033
          %1076 = vst [vmem:[#allocation4 + $0x8] sm:$0xff] %v1035
          %1077 = vst [vmem:[#allocation4 + $0x10] sm:$0xff] %v1038
          %1078 = vst [vmem:[#allocation4 + $0x18] sm:$0xff] %v1040
          %1079 = vst [vmem:[#allocation4 + $0x20] sm:$0xff] %v1043
          %1080 = vst [vmem:[#allocation4 + $0x28] sm:$0xff] %v1045
          %1081 = vst [vmem:[#allocation4 + $0x30] sm:$0xff] %v1048
          %1082 = vst [vmem:[#allocation4 + $0x38] sm:$0xff] %v1050
          %1083 = vst [vmem:[#allocation4 + $0x40] sm:$0xff] %v1053
          %1084 = vst [vmem:[#allocation4 + $0x48] sm:$0xff] %v1055
          %1085 = vst [vmem:[#allocation4 + $0x50] sm:$0xff] %v1058
          %1086 = vst [vmem:[#allocation4 + $0x58] sm:$0xff] %v1060
          %1087 = vst [vmem:[#allocation4 + $0x60] sm:$0xff] %v1063
          %1088 = vst [vmem:[#allocation4 + $0x68] sm:$0xff] %v1065
          %1089 = vst [vmem:[#allocation4 + $0x70] sm:$0xff] %v1068
          %1090 = vst [vmem:[#allocation4 + $0x78] sm:$0xff] %v1070
        $region111: #{tpu_custom_call.1} parent=63 // pred_fallthru
          _
        %p1091 = scmp.ne.s32.totalorder %s31, 0
        // Predicated region
        $region112: #{tpu_custom_call.1} parent=63 // pred_check
          %p1092 = pneg %p1091
        $region113: #{tpu_custom_call.1} parent=63 // pred_check_branch
          %1094 = sbr.rel (%p1092) target = $region115
        $region114: #{tpu_custom_call.1} parent=63 // pred_region
          %v1095 = vld [vmem:[#allocation4] sm:$0xff]
          %v1096 = vld [vmem:[#allocation4 + $0x8] sm:$0xff]
          %v1097 = vld [vmem:[#allocation4 + $0x10] sm:$0xff]
          %v1098 = vld [vmem:[#allocation4 + $0x18] sm:$0xff]
          %v1099 = vld [vmem:[#allocation4 + $0x20] sm:$0xff]
          %v1100 = vld [vmem:[#allocation4 + $0x28] sm:$0xff]
          %v1101 = vld [vmem:[#allocation4 + $0x30] sm:$0xff]
          %v1102 = vld [vmem:[#allocation4 + $0x38] sm:$0xff]
          %v1103 = vld [vmem:[#allocation4 + $0x40] sm:$0xff]
          %v1104 = vld [vmem:[#allocation4 + $0x48] sm:$0xff]
          %v1105 = vld [vmem:[#allocation4 + $0x50] sm:$0xff]
          %v1106 = vld [vmem:[#allocation4 + $0x58] sm:$0xff]
          %v1107 = vld [vmem:[#allocation4 + $0x60] sm:$0xff]
          %v1108 = vld [vmem:[#allocation4 + $0x68] sm:$0xff]
          %v1109 = vld [vmem:[#allocation4 + $0x70] sm:$0xff]
          %v1110 = vld [vmem:[#allocation4 + $0x78] sm:$0xff]
          %v1111 = vadd.f32 %v1095, %v1033
          %v1112 = vadd.f32 %v1096, %v1035
          %v1113 = vadd.f32 %v1097, %v1038
          %v1114 = vadd.f32 %v1098, %v1040
          %v1115 = vadd.f32 %v1099, %v1043
          %v1116 = vadd.f32 %v1100, %v1045
          %v1117 = vadd.f32 %v1101, %v1048
          %v1118 = vadd.f32 %v1102, %v1050
          %v1119 = vadd.f32 %v1103, %v1053
          %v1120 = vadd.f32 %v1104, %v1055
          %v1121 = vadd.f32 %v1105, %v1058
          %v1122 = vadd.f32 %v1106, %v1060
          %v1123 = vadd.f32 %v1107, %v1063
          %v1124 = vadd.f32 %v1108, %v1065
          %v1125 = vadd.f32 %v1109, %v1068
          %v1126 = vadd.f32 %v1110, %v1070
          %1127 = vst [vmem:[#allocation4] sm:$0xff] %v1111
          %1128 = vst [vmem:[#allocation4 + $0x8] sm:$0xff] %v1112
          %1129 = vst [vmem:[#allocation4 + $0x10] sm:$0xff] %v1113
          %1130 = vst [vmem:[#allocation4 + $0x18] sm:$0xff] %v1114
          %1131 = vst [vmem:[#allocation4 + $0x20] sm:$0xff] %v1115
          %1132 = vst [vmem:[#allocation4 + $0x28] sm:$0xff] %v1116
          %1133 = vst [vmem:[#allocation4 + $0x30] sm:$0xff] %v1117
          %1134 = vst [vmem:[#allocation4 + $0x38] sm:$0xff] %v1118
          %1135 = vst [vmem:[#allocation4 + $0x40] sm:$0xff] %v1119
          %1136 = vst [vmem:[#allocation4 + $0x48] sm:$0xff] %v1120
          %1137 = vst [vmem:[#allocation4 + $0x50] sm:$0xff] %v1121
          %1138 = vst [vmem:[#allocation4 + $0x58] sm:$0xff] %v1122
          %1139 = vst [vmem:[#allocation4 + $0x60] sm:$0xff] %v1123
          %1140 = vst [vmem:[#allocation4 + $0x68] sm:$0xff] %v1124
          %1141 = vst [vmem:[#allocation4 + $0x70] sm:$0xff] %v1125
          %1142 = vst [vmem:[#allocation4 + $0x78] sm:$0xff] %v1126
        $region115: #{tpu_custom_call.1} parent=63 // pred_fallthru
          _
        // Predicated region
        $region116: #{tpu_custom_call.1} parent=63 // pred_check
          %p1143 = pneg %p550
        $region117: #{tpu_custom_call.1} parent=63 // pred_check_branch
          %1145 = sbr.rel (%p1143) target = $region119
        $region118: #{tpu_custom_call.1} parent=63 // pred_region
          %v1146 = vld [vmem:[#allocation4] sm:$0xff]
          %v1147 = vld [vmem:[#allocation4 + $0x8] sm:$0xff]
          %v1148 = vld [vmem:[#allocation4 + $0x10] sm:$0xff]
          %v1149 = vld [vmem:[#allocation4 + $0x18] sm:$0xff]
          %v1150 = vld [vmem:[#allocation4 + $0x20] sm:$0xff]
          %v1151 = vld [vmem:[#allocation4 + $0x28] sm:$0xff]
          %v1152 = vld [vmem:[#allocation4 + $0x30] sm:$0xff]
          %v1153 = vld [vmem:[#allocation4 + $0x38] sm:$0xff]
          %v1154 = vld [vmem:[#allocation4 + $0x40] sm:$0xff]
          %v1155 = vld [vmem:[#allocation4 + $0x48] sm:$0xff]
          %v1156 = vld [vmem:[#allocation4 + $0x50] sm:$0xff]
          %v1157 = vld [vmem:[#allocation4 + $0x58] sm:$0xff]
          %v1158 = vld [vmem:[#allocation4 + $0x60] sm:$0xff]
          %v1159 = vld [vmem:[#allocation4 + $0x68] sm:$0xff]
          %v1160 = vld [vmem:[#allocation4 + $0x70] sm:$0xff]
          %v1161 = vld [vmem:[#allocation4 + $0x78] sm:$0xff]
          %v1162 = vpack.c.bf16 %v1147, %v1146
          %v1163 = vpack.c.bf16 %v1149, %v1148
          %v1164 = vpack.c.bf16 %v1151, %v1150
          %v1165 = vpack.c.bf16 %v1153, %v1152
          %v1166 = vpack.c.bf16 %v1155, %v1154
          %v1167 = vpack.c.bf16 %v1157, %v1156
          %v1168 = vpack.c.bf16 %v1159, %v1158
          %v1169 = vpack.c.bf16 %v1161, %v1160
          %v1170 = vld [vmem:[%s538] sm:$0xff]
          %v1171 = vld [vmem:[%s538 + $0x8] sm:$0xff]
          %v1172 = vld [vmem:[%s538 + $0x10] sm:$0xff]
          %v1173 = vld [vmem:[%s538 + $0x18] sm:$0xff]
          %v1174 = vld [vmem:[%s538 + $0x20] sm:$0xff]
          %v1175 = vld [vmem:[%s538 + $0x28] sm:$0xff]
          %v1176 = vld [vmem:[%s538 + $0x30] sm:$0xff]
          %v1177 = vld [vmem:[%s538 + $0x38] sm:$0xff]
          %v1178 = vld [vmem:[%s538 + $0x40] sm:$0xff]
          %v1179 = vld [vmem:[%s538 + $0x48] sm:$0xff]
          %v1180 = vld [vmem:[%s538 + $0x50] sm:$0xff]
          %v1181 = vld [vmem:[%s538 + $0x58] sm:$0xff]
          %v1182 = vld [vmem:[%s538 + $0x60] sm:$0xff]
          %v1183 = vld [vmem:[%s538 + $0x68] sm:$0xff]
          %v1184 = vld [vmem:[%s538 + $0x70] sm:$0xff]
          %v1185 = vld [vmem:[%s538 + $0x78] sm:$0xff]
          %v1186 = vld [vmem:[%s542] sm:$0x3]
          %v1188 = vperm.slane %v1186, 0
          %v1189 = vperm.slane %v1186, 1
          %v1208 = vunpack.c.l.b16 %v1170
          %v1209 = vunpack.c.h.b16 %v1170
          %v1210 = vunpack.c.l.b16 %v1171
          %v1211 = vunpack.c.h.b16 %v1171
          %v1212 = vunpack.c.l.b16 %v1172
          %v1213 = vunpack.c.h.b16 %v1172
          %v1214 = vunpack.c.l.b16 %v1173
          %v1215 = vunpack.c.h.b16 %v1173
          %v1216 = vunpack.c.l.b16 %v1174
          %v1217 = vunpack.c.h.b16 %v1174
          %v1218 = vunpack.c.l.b16 %v1175
          %v1219 = vunpack.c.h.b16 %v1175
          %v1220 = vunpack.c.l.b16 %v1176
          %v1221 = vunpack.c.h.b16 %v1176
          %v1222 = vunpack.c.l.b16 %v1177
          %v1223 = vunpack.c.h.b16 %v1177
          %v1224 = vunpack.c.l.b16 %v1178
          %v1225 = vunpack.c.h.b16 %v1178
          %v1226 = vunpack.c.l.b16 %v1179
          %v1227 = vunpack.c.h.b16 %v1179
          %v1228 = vunpack.c.l.b16 %v1180
          %v1229 = vunpack.c.h.b16 %v1180
          %v1230 = vunpack.c.l.b16 %v1181
          %v1231 = vunpack.c.h.b16 %v1181
          %v1232 = vunpack.c.l.b16 %v1182
          %v1233 = vunpack.c.h.b16 %v1182
          %v1234 = vunpack.c.l.b16 %v1183
          %v1235 = vunpack.c.h.b16 %v1183
          %v1236 = vunpack.c.l.b16 %v1184
          %v1237 = vunpack.c.h.b16 %v1184
          %v1238 = vunpack.c.l.b16 %v1185
          %v1239 = vunpack.c.h.b16 %v1185
          %v1240 = vpack.c.b16 %v1210, %v1208
          %v1241 = vpack.c.b16 %v1211, %v1209
          %v1242 = vpack.c.b16 %v1214, %v1212
          %v1243 = vpack.c.b16 %v1215, %v1213
          %v1244 = vpack.c.b16 %v1218, %v1216
          %v1245 = vpack.c.b16 %v1219, %v1217
          %v1246 = vpack.c.b16 %v1222, %v1220
          %v1247 = vpack.c.b16 %v1223, %v1221
          %v1248 = vpack.c.b16 %v1226, %v1224
          %v1249 = vpack.c.b16 %v1227, %v1225
          %v1250 = vpack.c.b16 %v1230, %v1228
          %v1251 = vpack.c.b16 %v1231, %v1229
          %v1252 = vpack.c.b16 %v1234, %v1232
          %v1253 = vpack.c.b16 %v1235, %v1233
          %v1254 = vpack.c.b16 %v1238, %v1236
          %v1255 = vpack.c.b16 %v1239, %v1237
          %1272 = vmatpush.bf16.msra.mxu0 %v1254
          %1273 = vmatpush.bf16.msra.mxu0 %v1252
          %1274 = vmatpush.bf16.msra.mxu0 %v1250
          %1275 = vmatpush.bf16.msra.mxu0 %v1248
          %1276 = vmatpush.bf16.msra.mxu0 %v1246
          %1277 = vmatpush.bf16.msra.mxu0 %v1244
          %1278 = vmatpush.bf16.msra.mxu0 %v1242
          %1279 = vmatpush.bf16.msra.mxu0 %v1240
          %1280 = vmatmul.bf16.gmra.mxu0 %v1162
          %v1281 = vpop.f32.mrf.mxu0
          %v1282 = vadd.f32 %v1188, %v1281
          %v1283 = vpop.f32.mrf.mxu0
          %v1284 = vadd.f32 %v1188, %v1283
          %1285 = vmatmul.bf16.gmra.mxu0 %v1163
          %v1286 = vpop.f32.mrf.mxu0
          %v1287 = vadd.f32 %v1188, %v1286
          %v1288 = vpop.f32.mrf.mxu0
          %v1289 = vadd.f32 %v1188, %v1288
          %1290 = vmatmul.bf16.gmra.mxu0 %v1164
          %v1291 = vpop.f32.mrf.mxu0
          %v1292 = vadd.f32 %v1188, %v1291
          %v1293 = vpop.f32.mrf.mxu0
          %v1294 = vadd.f32 %v1188, %v1293
          %1295 = vmatmul.bf16.gmra.mxu0 %v1165
          %v1296 = vpop.f32.mrf.mxu0
          %v1297 = vadd.f32 %v1188, %v1296
          %v1298 = vpop.f32.mrf.mxu0
          %v1299 = vadd.f32 %v1188, %v1298
          %1300 = vmatmul.bf16.gmra.mxu0 %v1166
          %v1301 = vpop.f32.mrf.mxu0
          %v1302 = vadd.f32 %v1188, %v1301
          %v1303 = vpop.f32.mrf.mxu0
          %v1304 = vadd.f32 %v1188, %v1303
          %1305 = vmatmul.bf16.gmra.mxu0 %v1167
          %v1306 = vpop.f32.mrf.mxu0
          %v1307 = vadd.f32 %v1188, %v1306
          %v1308 = vpop.f32.mrf.mxu0
          %v1309 = vadd.f32 %v1188, %v1308
          %1310 = vmatmul.bf16.gmra.mxu0 %v1168
          %v1311 = vpop.f32.mrf.mxu0
          %v1312 = vadd.f32 %v1188, %v1311
          %v1313 = vpop.f32.mrf.mxu0
          %v1314 = vadd.f32 %v1188, %v1313
          %1315 = vmatmul.bf16.gmra.mxu0 %v1169
          %v1316 = vpop.f32.mrf.mxu0
          %v1317 = vadd.f32 %v1188, %v1316
          %v1318 = vpop.f32.mrf.mxu0
          %v1319 = vadd.f32 %v1188, %v1318
          %1320 = vdwg.mxu0
          %1321 = vmatpush.bf16.msra.mxu0 %v1255
          %1322 = vmatpush.bf16.msra.mxu0 %v1253
          %1323 = vmatpush.bf16.msra.mxu0 %v1251
          %1324 = vmatpush.bf16.msra.mxu0 %v1249
          %1325 = vmatpush.bf16.msra.mxu0 %v1247
          %1326 = vmatpush.bf16.msra.mxu0 %v1245
          %1327 = vmatpush.bf16.msra.mxu0 %v1243
          %1328 = vmatpush.bf16.msra.mxu0 %v1241
          %1329 = vmatmul.bf16.gmra.mxu0 %v1162
          %v1330 = vpop.f32.mrf.mxu0
          %v1331 = vadd.f32 %v1189, %v1330
          %v1332 = vpop.f32.mrf.mxu0
          %v1333 = vadd.f32 %v1189, %v1332
          %1334 = vmatmul.bf16.gmra.mxu0 %v1163
          %v1335 = vpop.f32.mrf.mxu0
          %v1336 = vadd.f32 %v1189, %v1335
          %v1337 = vpop.f32.mrf.mxu0
          %v1338 = vadd.f32 %v1189, %v1337
          %1339 = vmatmul.bf16.gmra.mxu0 %v1164
          %v1340 = vpop.f32.mrf.mxu0
          %v1341 = vadd.f32 %v1189, %v1340
          %v1342 = vpop.f32.mrf.mxu0
          %v1343 = vadd.f32 %v1189, %v1342
          %1344 = vmatmul.bf16.gmra.mxu0 %v1165
          %v1345 = vpop.f32.mrf.mxu0
          %v1346 = vadd.f32 %v1189, %v1345
          %v1347 = vpop.f32.mrf.mxu0
          %v1348 = vadd.f32 %v1189, %v1347
          %1349 = vmatmul.bf16.gmra.mxu0 %v1166
          %v1350 = vpop.f32.mrf.mxu0
          %v1351 = vadd.f32 %v1189, %v1350
          %v1352 = vpop.f32.mrf.mxu0
          %v1353 = vadd.f32 %v1189, %v1352
          %1354 = vmatmul.bf16.gmra.mxu0 %v1167
          %v1355 = vpop.f32.mrf.mxu0
          %v1356 = vadd.f32 %v1189, %v1355
          %v1357 = vpop.f32.mrf.mxu0
          %v1358 = vadd.f32 %v1189, %v1357
          %1359 = vmatmul.bf16.gmra.mxu0 %v1168
          %v1360 = vpop.f32.mrf.mxu0
          %v1361 = vadd.f32 %v1189, %v1360
          %v1362 = vpop.f32.mrf.mxu0
          %v1363 = vadd.f32 %v1189, %v1362
          %1364 = vmatmul.bf16.gmra.mxu0 %v1169
          %v1365 = vpop.f32.mrf.mxu0
          %v1366 = vadd.f32 %v1189, %v1365
          %v1367 = vpop.f32.mrf.mxu0
          %v1368 = vadd.f32 %v1189, %v1367
          %1369 = vdwg.mxu0
          %v1370 = vld [vmem:[%s4] sm:$0xff]
          %v1371 = vld [vmem:[%s4 + $0x8] sm:$0xff]
          %v1372 = vld [vmem:[%s4 + $0x10] sm:$0xff]
          %v1373 = vld [vmem:[%s4 + $0x18] sm:$0xff]
          %v1374 = vld [vmem:[%s4 + $0x20] sm:$0xff]
          %v1375 = vld [vmem:[%s4 + $0x28] sm:$0xff]
          %v1376 = vld [vmem:[%s4 + $0x30] sm:$0xff]
          %v1377 = vld [vmem:[%s4 + $0x38] sm:$0xff]
          %v1378 = vld [vmem:[%s4 + $0x40] sm:$0xff]
          %v1379 = vld [vmem:[%s4 + $0x48] sm:$0xff]
          %v1380 = vld [vmem:[%s4 + $0x50] sm:$0xff]
          %v1381 = vld [vmem:[%s4 + $0x58] sm:$0xff]
          %v1382 = vld [vmem:[%s4 + $0x60] sm:$0xff]
          %v1383 = vld [vmem:[%s4 + $0x68] sm:$0xff]
          %v1384 = vld [vmem:[%s4 + $0x70] sm:$0xff]
          %v1385 = vld [vmem:[%s4 + $0x78] sm:$0xff]
          %1387 = vset.pattern.permute.xlu0 0
          %1388 = vperm.xlu0 %1387, %v1370
          %v1389 = vpop.permute.xlu0 %1388
          %1392 = vset.pattern.permute.xlu0 0
          %1393 = vperm.xlu0 %1392, %v1371
          %v1394 = vpop.permute.xlu0 %1393
          %1397 = vset.pattern.permute.xlu0 0
          %1398 = vperm.xlu0 %1397, %v1372
          %v1399 = vpop.permute.xlu0 %1398
          %1402 = vset.pattern.permute.xlu0 0
          %1403 = vperm.xlu0 %1402, %v1373
          %v1404 = vpop.permute.xlu0 %1403
          %1407 = vset.pattern.permute.xlu0 0
          %1408 = vperm.xlu0 %1407, %v1374
          %v1409 = vpop.permute.xlu0 %1408
          %1412 = vset.pattern.permute.xlu0 0
          %1413 = vperm.xlu0 %1412, %v1375
          %v1414 = vpop.permute.xlu0 %1413
          %1417 = vset.pattern.permute.xlu0 0
          %1418 = vperm.xlu0 %1417, %v1376
          %v1419 = vpop.permute.xlu0 %1418
          %1422 = vset.pattern.permute.xlu0 0
          %1423 = vperm.xlu0 %1422, %v1377
          %v1424 = vpop.permute.xlu0 %1423
          %1427 = vset.pattern.permute.xlu0 0
          %1428 = vperm.xlu0 %1427, %v1378
          %v1429 = vpop.permute.xlu0 %1428
          %1432 = vset.pattern.permute.xlu0 0
          %1433 = vperm.xlu0 %1432, %v1379
          %v1434 = vpop.permute.xlu0 %1433
          %1437 = vset.pattern.permute.xlu0 0
          %1438 = vperm.xlu0 %1437, %v1380
          %v1439 = vpop.permute.xlu0 %1438
          %1442 = vset.pattern.permute.xlu0 0
          %1443 = vperm.xlu0 %1442, %v1381
          %v1444 = vpop.permute.xlu0 %1443
          %1447 = vset.pattern.permute.xlu0 0
          %1448 = vperm.xlu0 %1447, %v1382
          %v1449 = vpop.permute.xlu0 %1448
          %1452 = vset.pattern.permute.xlu0 0
          %1453 = vperm.xlu0 %1452, %v1383
          %v1454 = vpop.permute.xlu0 %1453
          %1457 = vset.pattern.permute.xlu0 0
          %1458 = vperm.xlu0 %1457, %v1384
          %v1459 = vpop.permute.xlu0 %1458
          %1462 = vset.pattern.permute.xlu0 0
          %1463 = vperm.xlu0 %1462, %v1385
          %v1464 = vpop.permute.xlu0 %1463
          %v1466 = vmul.f32 %v1389, %v1282
          %v1467 = vmul.f32 %v1394, %v1284
          %v1468 = vmul.f32 %v1399, %v1287
          %v1469 = vmul.f32 %v1404, %v1289
          %v1470 = vmul.f32 %v1409, %v1292
          %v1471 = vmul.f32 %v1414, %v1294
          %v1472 = vmul.f32 %v1419, %v1297
          %v1473 = vmul.f32 %v1424, %v1299
          %v1474 = vmul.f32 %v1429, %v1302
          %v1475 = vmul.f32 %v1434, %v1304
          %v1476 = vmul.f32 %v1439, %v1307
          %v1477 = vmul.f32 %v1444, %v1309
          %v1478 = vmul.f32 %v1449, %v1312
          %v1479 = vmul.f32 %v1454, %v1314
          %v1480 = vmul.f32 %v1459, %v1317
          %v1481 = vmul.f32 %v1464, %v1319
          %1482 = vset.pattern.permute.xlu0 1
          %1483 = vperm.xlu0 %1482, %v1370
          %v1484 = vpop.permute.xlu0 %1483
          %1486 = vset.pattern.permute.xlu0 1
          %1487 = vperm.xlu0 %1486, %v1371
          %v1488 = vpop.permute.xlu0 %1487
          %1490 = vset.pattern.permute.xlu0 1
          %1491 = vperm.xlu0 %1490, %v1372
          %v1492 = vpop.permute.xlu0 %1491
          %1494 = vset.pattern.permute.xlu0 1
          %1495 = vperm.xlu0 %1494, %v1373
          %v1496 = vpop.permute.xlu0 %1495
          %1498 = vset.pattern.permute.xlu0 1
          %1499 = vperm.xlu0 %1498, %v1374
          %v1500 = vpop.permute.xlu0 %1499
          %1502 = vset.pattern.permute.xlu0 1
          %1503 = vperm.xlu0 %1502, %v1375
          %v1504 = vpop.permute.xlu0 %1503
          %1506 = vset.pattern.permute.xlu0 1
          %1507 = vperm.xlu0 %1506, %v1376
          %v1508 = vpop.permute.xlu0 %1507
          %1510 = vset.pattern.permute.xlu0 1
          %1511 = vperm.xlu0 %1510, %v1377
          %v1512 = vpop.permute.xlu0 %1511
          %1514 = vset.pattern.permute.xlu0 1
          %1515 = vperm.xlu0 %1514, %v1378
          %v1516 = vpop.permute.xlu0 %1515
          %1518 = vset.pattern.permute.xlu0 1
          %1519 = vperm.xlu0 %1518, %v1379
          %v1520 = vpop.permute.xlu0 %1519
          %1522 = vset.pattern.permute.xlu0 1
          %1523 = vperm.xlu0 %1522, %v1380
          %v1524 = vpop.permute.xlu0 %1523
          %1526 = vset.pattern.permute.xlu0 1
          %1527 = vperm.xlu0 %1526, %v1381
          %v1528 = vpop.permute.xlu0 %1527
          %1530 = vset.pattern.permute.xlu0 1
          %1531 = vperm.xlu0 %1530, %v1382
          %v1532 = vpop.permute.xlu0 %1531
          %1534 = vset.pattern.permute.xlu0 1
          %1535 = vperm.xlu0 %1534, %v1383
          %v1536 = vpop.permute.xlu0 %1535
          %1538 = vset.pattern.permute.xlu0 1
          %1539 = vperm.xlu0 %1538, %v1384
          %v1540 = vpop.permute.xlu0 %1539
          %1542 = vset.pattern.permute.xlu0 1
          %1543 = vperm.xlu0 %1542, %v1385
          %v1544 = vpop.permute.xlu0 %1543
          %v1546 = vmul.f32 %v1484, %v1331
          %v1547 = vmul.f32 %v1488, %v1333
          %v1548 = vmul.f32 %v1492, %v1336
          %v1549 = vmul.f32 %v1496, %v1338
          %v1550 = vmul.f32 %v1500, %v1341
          %v1551 = vmul.f32 %v1504, %v1343
          %v1552 = vmul.f32 %v1508, %v1346
          %v1553 = vmul.f32 %v1512, %v1348
          %v1554 = vmul.f32 %v1516, %v1351
          %v1555 = vmul.f32 %v1520, %v1353
          %v1556 = vmul.f32 %v1524, %v1356
          %v1557 = vmul.f32 %v1528, %v1358
          %v1558 = vmul.f32 %v1532, %v1361
          %v1559 = vmul.f32 %v1536, %v1363
          %v1560 = vmul.f32 %v1540, %v1366
          %v1561 = vmul.f32 %v1544, %v1368
          %v1562 = vadd.f32 %v1466, %v1546
          %v1563 = vadd.f32 %v1467, %v1547
          %v1564 = vadd.f32 %v1468, %v1548
          %v1565 = vadd.f32 %v1469, %v1549
          %v1566 = vadd.f32 %v1470, %v1550
          %v1567 = vadd.f32 %v1471, %v1551
          %v1568 = vadd.f32 %v1472, %v1552
          %v1569 = vadd.f32 %v1473, %v1553
          %v1570 = vadd.f32 %v1474, %v1554
          %v1571 = vadd.f32 %v1475, %v1555
          %v1572 = vadd.f32 %v1476, %v1556
          %v1573 = vadd.f32 %v1477, %v1557
          %v1574 = vadd.f32 %v1478, %v1558
          %v1575 = vadd.f32 %v1479, %v1559
          %v1576 = vadd.f32 %v1480, %v1560
          %v1577 = vadd.f32 %v1481, %v1561
          %v1578 = vmax.f32 %v1562, 0.0
          %v1579 = vmax.f32 %v1563, 0.0
          %v1580 = vmax.f32 %v1564, 0.0
          %v1581 = vmax.f32 %v1565, 0.0
          %v1582 = vmax.f32 %v1566, 0.0
          %v1583 = vmax.f32 %v1567, 0.0
          %v1584 = vmax.f32 %v1568, 0.0
          %v1585 = vmax.f32 %v1569, 0.0
          %v1586 = vmax.f32 %v1570, 0.0
          %v1587 = vmax.f32 %v1571, 0.0
          %v1588 = vmax.f32 %v1572, 0.0
          %v1589 = vmax.f32 %v1573, 0.0
          %v1590 = vmax.f32 %v1574, 0.0
          %v1591 = vmax.f32 %v1575, 0.0
          %v1592 = vmax.f32 %v1576, 0.0
          %v1593 = vmax.f32 %v1577, 0.0
          %v1594 = vlaneseq
          %v1595 = vand.u32 %v1594, 127
          %vm1596 = vcmp.lt.s32.totalorder %v1595, 32
          %v1597 = vsel %vm1596, 1, 0
          %v1598 = vcvt.s32.f32 %v1597
          %v1599 = vmul.f32 %v1578, %v1598
          %v1600 = vmul.f32 %v1579, %v1598
          %v1601 = vmul.f32 %v1580, %v1598
          %v1602 = vmul.f32 %v1581, %v1598
          %v1603 = vmul.f32 %v1582, %v1598
          %v1604 = vmul.f32 %v1583, %v1598
          %v1605 = vmul.f32 %v1584, %v1598
          %v1606 = vmul.f32 %v1585, %v1598
          %v1607 = vmul.f32 %v1586, %v1598
          %v1608 = vmul.f32 %v1587, %v1598
          %v1609 = vmul.f32 %v1588, %v1598
          %v1610 = vmul.f32 %v1589, %v1598
          %v1611 = vmul.f32 %v1590, %v1598
          %v1612 = vmul.f32 %v1591, %v1598
          %v1613 = vmul.f32 %v1592, %v1598
          %v1614 = vmul.f32 %v1593, %v1598
          %1615 = vadd.xlane.f32.xlu0 %v1599
          %v1616 = vpop.xlane.xlu0 %1615
          %1617 = vadd.xlane.f32.xlu0 %v1600
          %v1618 = vpop.xlane.xlu0 %1617
          %1619 = vadd.xlane.f32.xlu0 %v1601
          %v1620 = vpop.xlane.xlu0 %1619
          %1621 = vadd.xlane.f32.xlu0 %v1602
          %v1622 = vpop.xlane.xlu0 %1621
          %1623 = vadd.xlane.f32.xlu0 %v1603
          %v1624 = vpop.xlane.xlu0 %1623
          %1625 = vadd.xlane.f32.xlu0 %v1604
          %v1626 = vpop.xlane.xlu0 %1625
          %1627 = vadd.xlane.f32.xlu0 %v1605
          %v1628 = vpop.xlane.xlu0 %1627
          %1629 = vadd.xlane.f32.xlu0 %v1606
          %v1630 = vpop.xlane.xlu0 %1629
          %1631 = vadd.xlane.f32.xlu0 %v1607
          %v1632 = vpop.xlane.xlu0 %1631
          %1633 = vadd.xlane.f32.xlu0 %v1608
          %v1634 = vpop.xlane.xlu0 %1633
          %1635 = vadd.xlane.f32.xlu0 %v1609
          %v1636 = vpop.xlane.xlu0 %1635
          %1637 = vadd.xlane.f32.xlu0 %v1610
          %v1638 = vpop.xlane.xlu0 %1637
          %1639 = vadd.xlane.f32.xlu0 %v1611
          %v1640 = vpop.xlane.xlu0 %1639
          %1641 = vadd.xlane.f32.xlu0 %v1612
          %v1642 = vpop.xlane.xlu0 %1641
          %1643 = vadd.xlane.f32.xlu0 %v1613
          %v1644 = vpop.xlane.xlu0 %1643
          %1645 = vadd.xlane.f32.xlu0 %v1614
          %v1646 = vpop.xlane.xlu0 %1645
          %v1647 = vmul.f32 %v1616, 0.03125
          %v1648 = vmul.f32 %v1618, 0.03125
          %v1649 = vmul.f32 %v1620, 0.03125
          %v1650 = vmul.f32 %v1622, 0.03125
          %v1651 = vmul.f32 %v1624, 0.03125
          %v1652 = vmul.f32 %v1626, 0.03125
          %v1653 = vmul.f32 %v1628, 0.03125
          %v1654 = vmul.f32 %v1630, 0.03125
          %v1655 = vmul.f32 %v1632, 0.03125
          %v1656 = vmul.f32 %v1634, 0.03125
          %v1657 = vmul.f32 %v1636, 0.03125
          %v1658 = vmul.f32 %v1638, 0.03125
          %v1659 = vmul.f32 %v1640, 0.03125
          %v1660 = vmul.f32 %v1642, 0.03125
          %v1661 = vmul.f32 %v1644, 0.03125
          %v1662 = vmul.f32 %v1646, 0.03125
          %v1663 = vsub.f32 %v1599, %v1647
          %v1664 = vsub.f32 %v1600, %v1648
          %v1665 = vsub.f32 %v1601, %v1649
          %v1666 = vsub.f32 %v1602, %v1650
          %v1667 = vsub.f32 %v1603, %v1651
          %v1668 = vsub.f32 %v1604, %v1652
          %v1669 = vsub.f32 %v1605, %v1653
          %v1670 = vsub.f32 %v1606, %v1654
          %v1671 = vsub.f32 %v1607, %v1655
          %v1672 = vsub.f32 %v1608, %v1656
          %v1673 = vsub.f32 %v1609, %v1657
          %v1674 = vsub.f32 %v1610, %v1658
          %v1675 = vsub.f32 %v1611, %v1659
          %v1676 = vsub.f32 %v1612, %v1660
          %v1677 = vsub.f32 %v1613, %v1661
          %v1678 = vsub.f32 %v1614, %v1662
          %v1679 = vmul.f32 %v1663, %v1598
          %v1680 = vmul.f32 %v1664, %v1598
          %v1681 = vmul.f32 %v1665, %v1598
          %v1682 = vmul.f32 %v1666, %v1598
          %v1683 = vmul.f32 %v1667, %v1598
          %v1684 = vmul.f32 %v1668, %v1598
          %v1685 = vmul.f32 %v1669, %v1598
          %v1686 = vmul.f32 %v1670, %v1598
          %v1687 = vmul.f32 %v1671, %v1598
          %v1688 = vmul.f32 %v1672, %v1598
          %v1689 = vmul.f32 %v1673, %v1598
          %v1690 = vmul.f32 %v1674, %v1598
          %v1691 = vmul.f32 %v1675, %v1598
          %v1692 = vmul.f32 %v1676, %v1598
          %v1693 = vmul.f32 %v1677, %v1598
          %v1694 = vmul.f32 %v1678, %v1598
          %v1695 = vmul.f32 %v1679, %v1679
          %v1696 = vmul.f32 %v1680, %v1680
          %v1697 = vmul.f32 %v1681, %v1681
          %v1698 = vmul.f32 %v1682, %v1682
          %v1699 = vmul.f32 %v1683, %v1683
          %v1700 = vmul.f32 %v1684, %v1684
          %v1701 = vmul.f32 %v1685, %v1685
          %v1702 = vmul.f32 %v1686, %v1686
          %v1703 = vmul.f32 %v1687, %v1687
          %v1704 = vmul.f32 %v1688, %v1688
          %v1705 = vmul.f32 %v1689, %v1689
          %v1706 = vmul.f32 %v1690, %v1690
          %v1707 = vmul.f32 %v1691, %v1691
          %v1708 = vmul.f32 %v1692, %v1692
          %v1709 = vmul.f32 %v1693, %v1693
          %v1710 = vmul.f32 %v1694, %v1694
          %1711 = vadd.xlane.f32.xlu0 %v1695
          %v1712 = vpop.xlane.xlu0 %1711
          %1713 = vadd.xlane.f32.xlu0 %v1696
          %v1714 = vpop.xlane.xlu0 %1713
          %1715 = vadd.xlane.f32.xlu0 %v1697
          %v1716 = vpop.xlane.xlu0 %1715
          %1717 = vadd.xlane.f32.xlu0 %v1698
          %v1718 = vpop.xlane.xlu0 %1717
          %1719 = vadd.xlane.f32.xlu0 %v1699
          %v1720 = vpop.xlane.xlu0 %1719
          %1721 = vadd.xlane.f32.xlu0 %v1700
          %v1722 = vpop.xlane.xlu0 %1721
          %1723 = vadd.xlane.f32.xlu0 %v1701
          %v1724 = vpop.xlane.xlu0 %1723
          %1725 = vadd.xlane.f32.xlu0 %v1702
          %v1726 = vpop.xlane.xlu0 %1725
          %1727 = vadd.xlane.f32.xlu0 %v1703
          %v1728 = vpop.xlane.xlu0 %1727
          %1729 = vadd.xlane.f32.xlu0 %v1704
          %v1730 = vpop.xlane.xlu0 %1729
          %1731 = vadd.xlane.f32.xlu0 %v1705
          %v1732 = vpop.xlane.xlu0 %1731
          %1733 = vadd.xlane.f32.xlu0 %v1706
          %v1734 = vpop.xlane.xlu0 %1733
          %1735 = vadd.xlane.f32.xlu0 %v1707
          %v1736 = vpop.xlane.xlu0 %1735
          %1737 = vadd.xlane.f32.xlu0 %v1708
          %v1738 = vpop.xlane.xlu0 %1737
          %1739 = vadd.xlane.f32.xlu0 %v1709
          %v1740 = vpop.xlane.xlu0 %1739
          %1741 = vadd.xlane.f32.xlu0 %v1710
          %v1742 = vpop.xlane.xlu0 %1741
          %v1743 = vmul.f32 %v1712, 0.03125
          %v1744 = vmul.f32 %v1714, 0.03125
          %v1745 = vmul.f32 %v1716, 0.03125
          %v1746 = vmul.f32 %v1718, 0.03125
          %v1747 = vmul.f32 %v1720, 0.03125
          %v1748 = vmul.f32 %v1722, 0.03125
          %v1749 = vmul.f32 %v1724, 0.03125
          %v1750 = vmul.f32 %v1726, 0.03125
          %v1751 = vmul.f32 %v1728, 0.03125
          %v1752 = vmul.f32 %v1730, 0.03125
          %v1753 = vmul.f32 %v1732, 0.03125
          %v1754 = vmul.f32 %v1734, 0.03125
          %v1755 = vmul.f32 %v1736, 0.03125
          %v1756 = vmul.f32 %v1738, 0.03125
          %v1757 = vmul.f32 %v1740, 0.03125
          %v1758 = vmul.f32 %v1742, 0.03125
          %v1759 = vadd.f32 %v1743, 1e-05
          %v1760 = vadd.f32 %v1744, 1e-05
          %v1761 = vadd.f32 %v1745, 1e-05
          %v1762 = vadd.f32 %v1746, 1e-05
          %v1763 = vadd.f32 %v1747, 1e-05
          %v1764 = vadd.f32 %v1748, 1e-05
          %v1765 = vadd.f32 %v1749, 1e-05
          %v1766 = vadd.f32 %v1750, 1e-05
          %v1767 = vadd.f32 %v1751, 1e-05
          %v1768 = vadd.f32 %v1752, 1e-05
          %v1769 = vadd.f32 %v1753, 1e-05
          %v1770 = vadd.f32 %v1754, 1e-05
          %v1771 = vadd.f32 %v1755, 1e-05
          %v1772 = vadd.f32 %v1756, 1e-05
          %v1773 = vadd.f32 %v1757, 1e-05
          %v1774 = vadd.f32 %v1758, 1e-05
          %v1775 = vrsqrt.pop %v1759
          %v1776 = vmul.f32 %v1775, %v1759
          %v1777 = vmul.f32 %v1776, %v1775
          %v1778 = vmul.f32 0.5, %v1777
          %v1779 = vsub.f32 1.5, %v1778
          %v1780 = vmul.f32 %v1775, %v1779
          %vm1781 = vweird.f32 %v1759
          %vm1782 = vweird.f32 %v1775
          %vm1783 = vmor %vm1781, %vm1782
          %v1784 = vsel %vm1783, %v1775, %v1780
          %v1785 = vrsqrt.pop %v1760
          %v1786 = vmul.f32 %v1785, %v1760
          %v1787 = vmul.f32 %v1786, %v1785
          %v1788 = vmul.f32 0.5, %v1787
          %v1789 = vsub.f32 1.5, %v1788
          %v1790 = vmul.f32 %v1785, %v1789
          %vm1791 = vweird.f32 %v1760
          %vm1792 = vweird.f32 %v1785
          %vm1793 = vmor %vm1791, %vm1792
          %v1794 = vsel %vm1793, %v1785, %v1790
          %v1795 = vrsqrt.pop %v1761
          %v1796 = vmul.f32 %v1795, %v1761
          %v1797 = vmul.f32 %v1796, %v1795
          %v1798 = vmul.f32 0.5, %v1797
          %v1799 = vsub.f32 1.5, %v1798
          %v1800 = vmul.f32 %v1795, %v1799
          %vm1801 = vweird.f32 %v1761
          %vm1802 = vweird.f32 %v1795
          %vm1803 = vmor %vm1801, %vm1802
          %v1804 = vsel %vm1803, %v1795, %v1800
          %v1805 = vrsqrt.pop %v1762
          %v1806 = vmul.f32 %v1805, %v1762
          %v1807 = vmul.f32 %v1806, %v1805
          %v1808 = vmul.f32 0.5, %v1807
          %v1809 = vsub.f32 1.5, %v1808
          %v1810 = vmul.f32 %v1805, %v1809
          %vm1811 = vweird.f32 %v1762
          %vm1812 = vweird.f32 %v1805
          %vm1813 = vmor %vm1811, %vm1812
          %v1814 = vsel %vm1813, %v1805, %v1810
          %v1815 = vrsqrt.pop %v1763
          %v1816 = vmul.f32 %v1815, %v1763
          %v1817 = vmul.f32 %v1816, %v1815
          %v1818 = vmul.f32 0.5, %v1817
          %v1819 = vsub.f32 1.5, %v1818
          %v1820 = vmul.f32 %v1815, %v1819
          %vm1821 = vweird.f32 %v1763
          %vm1822 = vweird.f32 %v1815
          %vm1823 = vmor %vm1821, %vm1822
          %v1824 = vsel %vm1823, %v1815, %v1820
          %v1825 = vrsqrt.pop %v1764
          %v1826 = vmul.f32 %v1825, %v1764
          %v1827 = vmul.f32 %v1826, %v1825
          %v1828 = vmul.f32 0.5, %v1827
          %v1829 = vsub.f32 1.5, %v1828
          %v1830 = vmul.f32 %v1825, %v1829
          %vm1831 = vweird.f32 %v1764
          %vm1832 = vweird.f32 %v1825
          %vm1833 = vmor %vm1831, %vm1832
          %v1834 = vsel %vm1833, %v1825, %v1830
          %v1835 = vrsqrt.pop %v1765
          %v1836 = vmul.f32 %v1835, %v1765
          %v1837 = vmul.f32 %v1836, %v1835
          %v1838 = vmul.f32 0.5, %v1837
          %v1839 = vsub.f32 1.5, %v1838
          %v1840 = vmul.f32 %v1835, %v1839
          %vm1841 = vweird.f32 %v1765
          %vm1842 = vweird.f32 %v1835
          %vm1843 = vmor %vm1841, %vm1842
          %v1844 = vsel %vm1843, %v1835, %v1840
          %v1845 = vrsqrt.pop %v1766
          %v1846 = vmul.f32 %v1845, %v1766
          %v1847 = vmul.f32 %v1846, %v1845
          %v1848 = vmul.f32 0.5, %v1847
          %v1849 = vsub.f32 1.5, %v1848
          %v1850 = vmul.f32 %v1845, %v1849
          %vm1851 = vweird.f32 %v1766
          %vm1852 = vweird.f32 %v1845
          %vm1853 = vmor %vm1851, %vm1852
          %v1854 = vsel %vm1853, %v1845, %v1850
          %v1855 = vrsqrt.pop %v1767
          %v1856 = vmul.f32 %v1855, %v1767
          %v1857 = vmul.f32 %v1856, %v1855
          %v1858 = vmul.f32 0.5, %v1857
          %v1859 = vsub.f32 1.5, %v1858
          %v1860 = vmul.f32 %v1855, %v1859
          %vm1861 = vweird.f32 %v1767
          %vm1862 = vweird.f32 %v1855
          %vm1863 = vmor %vm1861, %vm1862
          %v1864 = vsel %vm1863, %v1855, %v1860
          %v1865 = vrsqrt.pop %v1768
          %v1866 = vmul.f32 %v1865, %v1768
          %v1867 = vmul.f32 %v1866, %v1865
          %v1868 = vmul.f32 0.5, %v1867
          %v1869 = vsub.f32 1.5, %v1868
          %v1870 = vmul.f32 %v1865, %v1869
          %vm1871 = vweird.f32 %v1768
          %vm1872 = vweird.f32 %v1865
          %vm1873 = vmor %vm1871, %vm1872
          %v1874 = vsel %vm1873, %v1865, %v1870
          %v1875 = vrsqrt.pop %v1769
          %v1876 = vmul.f32 %v1875, %v1769
          %v1877 = vmul.f32 %v1876, %v1875
          %v1878 = vmul.f32 0.5, %v1877
          %v1879 = vsub.f32 1.5, %v1878
          %v1880 = vmul.f32 %v1875, %v1879
          %vm1881 = vweird.f32 %v1769
          %vm1882 = vweird.f32 %v1875
          %vm1883 = vmor %vm1881, %vm1882
          %v1884 = vsel %vm1883, %v1875, %v1880
          %v1885 = vrsqrt.pop %v1770
          %v1886 = vmul.f32 %v1885, %v1770
          %v1887 = vmul.f32 %v1886, %v1885
          %v1888 = vmul.f32 0.5, %v1887
          %v1889 = vsub.f32 1.5, %v1888
          %v1890 = vmul.f32 %v1885, %v1889
          %vm1891 = vweird.f32 %v1770
          %vm1892 = vweird.f32 %v1885
          %vm1893 = vmor %vm1891, %vm1892
          %v1894 = vsel %vm1893, %v1885, %v1890
          %v1895 = vrsqrt.pop %v1771
          %v1896 = vmul.f32 %v1895, %v1771
          %v1897 = vmul.f32 %v1896, %v1895
          %v1898 = vmul.f32 0.5, %v1897
          %v1899 = vsub.f32 1.5, %v1898
          %v1900 = vmul.f32 %v1895, %v1899
          %vm1901 = vweird.f32 %v1771
          %vm1902 = vweird.f32 %v1895
          %vm1903 = vmor %vm1901, %vm1902
          %v1904 = vsel %vm1903, %v1895, %v1900
          %v1905 = vrsqrt.pop %v1772
          %v1906 = vmul.f32 %v1905, %v1772
          %v1907 = vmul.f32 %v1906, %v1905
          %v1908 = vmul.f32 0.5, %v1907
          %v1909 = vsub.f32 1.5, %v1908
          %v1910 = vmul.f32 %v1905, %v1909
          %vm1911 = vweird.f32 %v1772
          %vm1912 = vweird.f32 %v1905
          %vm1913 = vmor %vm1911, %vm1912
          %v1914 = vsel %vm1913, %v1905, %v1910
          %v1915 = vrsqrt.pop %v1773
          %v1916 = vmul.f32 %v1915, %v1773
          %v1917 = vmul.f32 %v1916, %v1915
          %v1918 = vmul.f32 0.5, %v1917
          %v1919 = vsub.f32 1.5, %v1918
          %v1920 = vmul.f32 %v1915, %v1919
          %vm1921 = vweird.f32 %v1773
          %vm1922 = vweird.f32 %v1915
          %vm1923 = vmor %vm1921, %vm1922
          %v1924 = vsel %vm1923, %v1915, %v1920
          %v1925 = vrsqrt.pop %v1774
          %v1926 = vmul.f32 %v1925, %v1774
          %v1927 = vmul.f32 %v1926, %v1925
          %v1928 = vmul.f32 0.5, %v1927
          %v1929 = vsub.f32 1.5, %v1928
          %v1930 = vmul.f32 %v1925, %v1929
          %vm1931 = vweird.f32 %v1774
          %vm1932 = vweird.f32 %v1925
          %vm1933 = vmor %vm1931, %vm1932
          %v1934 = vsel %vm1933, %v1925, %v1930
          %v1935 = vmul.f32 %v1679, %v1784
          %v1936 = vmul.f32 %v1680, %v1794
          %v1937 = vmul.f32 %v1681, %v1804
          %v1938 = vmul.f32 %v1682, %v1814
          %v1939 = vmul.f32 %v1683, %v1824
          %v1940 = vmul.f32 %v1684, %v1834
          %v1941 = vmul.f32 %v1685, %v1844
          %v1942 = vmul.f32 %v1686, %v1854
          %v1943 = vmul.f32 %v1687, %v1864
          %v1944 = vmul.f32 %v1688, %v1874
          %v1945 = vmul.f32 %v1689, %v1884
          %v1946 = vmul.f32 %v1690, %v1894
          %v1947 = vmul.f32 %v1691, %v1904
          %v1948 = vmul.f32 %v1692, %v1914
          %v1949 = vmul.f32 %v1693, %v1924
          %v1950 = vmul.f32 %v1694, %v1934
          %v1951 = vld [vmem:[%s545] sm:$0x1]
          %v1953 = vperm.slane %v1951, 0
          %v1955 = vmul.f32 %v1935, %v1953
          %v1956 = vmul.f32 %v1936, %v1953
          %v1957 = vmul.f32 %v1937, %v1953
          %v1958 = vmul.f32 %v1938, %v1953
          %v1959 = vmul.f32 %v1939, %v1953
          %v1960 = vmul.f32 %v1940, %v1953
          %v1961 = vmul.f32 %v1941, %v1953
          %v1962 = vmul.f32 %v1942, %v1953
          %v1963 = vmul.f32 %v1943, %v1953
          %v1964 = vmul.f32 %v1944, %v1953
          %v1965 = vmul.f32 %v1945, %v1953
          %v1966 = vmul.f32 %v1946, %v1953
          %v1967 = vmul.f32 %v1947, %v1953
          %v1968 = vmul.f32 %v1948, %v1953
          %v1969 = vmul.f32 %v1949, %v1953
          %v1970 = vmul.f32 %v1950, %v1953
          %v1971 = vld [vmem:[%s548] sm:$0x1]
          %v1973 = vperm.slane %v1971, 0
          %v1975 = vadd.f32 %v1955, %v1973
          %v1976 = vadd.f32 %v1956, %v1973
          %v1977 = vadd.f32 %v1957, %v1973
          %v1978 = vadd.f32 %v1958, %v1973
          %v1979 = vadd.f32 %v1959, %v1973
          %v1980 = vadd.f32 %v1960, %v1973
          %v1981 = vadd.f32 %v1961, %v1973
          %v1982 = vadd.f32 %v1962, %v1973
          %v1983 = vadd.f32 %v1963, %v1973
          %v1984 = vadd.f32 %v1964, %v1973
          %v1985 = vadd.f32 %v1965, %v1973
          %v1986 = vadd.f32 %v1966, %v1973
          %v1987 = vadd.f32 %v1967, %v1973
          %v1988 = vadd.f32 %v1968, %v1973
          %v1989 = vadd.f32 %v1969, %v1973
          %v1990 = vadd.f32 %v1970, %v1973
          %v1991 = vld [vmem:[%s461] sm:$0x1]
          %v1992 = vld [vmem:[#allocation2] sm:$0xff]
          %v1993 = vld [vmem:[#allocation2 + $0x8] sm:$0xff]
          %v1994 = vld [vmem:[#allocation2 + $0x10] sm:$0xff]
          %v1995 = vld [vmem:[#allocation2 + $0x18] sm:$0xff]
          %v1996 = vld [vmem:[#allocation2 + $0x20] sm:$0xff]
          %v1997 = vld [vmem:[#allocation2 + $0x28] sm:$0xff]
          %v1998 = vld [vmem:[#allocation2 + $0x30] sm:$0xff]
          %v1999 = vld [vmem:[#allocation2 + $0x38] sm:$0xff]
          %v2000 = vld [vmem:[#allocation2 + $0x40] sm:$0xff]
          %v2001 = vld [vmem:[#allocation2 + $0x48] sm:$0xff]
          %v2002 = vld [vmem:[#allocation2 + $0x50] sm:$0xff]
          %v2003 = vld [vmem:[#allocation2 + $0x58] sm:$0xff]
          %v2004 = vld [vmem:[#allocation2 + $0x60] sm:$0xff]
          %v2005 = vld [vmem:[#allocation2 + $0x68] sm:$0xff]
          %v2006 = vld [vmem:[#allocation2 + $0x70] sm:$0xff]
          %v2007 = vld [vmem:[#allocation2 + $0x78] sm:$0xff]
          %v2009 = vperm.slane %v1991, 0
          %v2011 = vmul.f32 %v2009, %v1992
          %v2012 = vmul.f32 %v2009, %v1993
          %v2013 = vmul.f32 %v2009, %v1994
          %v2014 = vmul.f32 %v2009, %v1995
          %v2015 = vmul.f32 %v2009, %v1996
          %v2016 = vmul.f32 %v2009, %v1997
          %v2017 = vmul.f32 %v2009, %v1998
          %v2018 = vmul.f32 %v2009, %v1999
          %v2019 = vmul.f32 %v2009, %v2000
          %v2020 = vmul.f32 %v2009, %v2001
          %v2021 = vmul.f32 %v2009, %v2002
          %v2022 = vmul.f32 %v2009, %v2003
          %v2023 = vmul.f32 %v2009, %v2004
          %v2024 = vmul.f32 %v2009, %v2005
          %v2025 = vmul.f32 %v2009, %v2006
          %v2026 = vmul.f32 %v2009, %v2007
          %v2027 = vadd.f32 %v1975, %v2011
          %v2028 = vadd.f32 %v1976, %v2012
          %v2029 = vadd.f32 %v1977, %v2013
          %v2030 = vadd.f32 %v1978, %v2014
          %v2031 = vadd.f32 %v1979, %v2015
          %v2032 = vadd.f32 %v1980, %v2016
          %v2033 = vadd.f32 %v1981, %v2017
          %v2034 = vadd.f32 %v1982, %v2018
          %v2035 = vadd.f32 %v1983, %v2019
          %v2036 = vadd.f32 %v1984, %v2020
          %v2037 = vadd.f32 %v1985, %v2021
          %v2038 = vadd.f32 %v1986, %v2022
          %v2039 = vadd.f32 %v1987, %v2023
          %v2040 = vadd.f32 %v1988, %v2024
          %v2041 = vadd.f32 %v1989, %v2025
          %v2042 = vadd.f32 %v1990, %v2026
          %2043 = vst [vmem:[#allocation2] sm:$0xff] %v2027
          %2044 = vst [vmem:[#allocation2 + $0x8] sm:$0xff] %v2028
          %2045 = vst [vmem:[#allocation2 + $0x10] sm:$0xff] %v2029
          %2046 = vst [vmem:[#allocation2 + $0x18] sm:$0xff] %v2030
          %2047 = vst [vmem:[#allocation2 + $0x20] sm:$0xff] %v2031
          %2048 = vst [vmem:[#allocation2 + $0x28] sm:$0xff] %v2032
          %2049 = vst [vmem:[#allocation2 + $0x30] sm:$0xff] %v2033
          %2050 = vst [vmem:[#allocation2 + $0x38] sm:$0xff] %v2034
          %2051 = vst [vmem:[#allocation2 + $0x40] sm:$0xff] %v2035
          %2052 = vst [vmem:[#allocation2 + $0x48] sm:$0xff] %v2036
          %2053 = vst [vmem:[#allocation2 + $0x50] sm:$0xff] %v2037
          %2054 = vst [vmem:[#allocation2 + $0x58] sm:$0xff] %v2038
          %2055 = vst [vmem:[#allocation2 + $0x60] sm:$0xff] %v2039
          %2056 = vst [vmem:[#allocation2 + $0x68] sm:$0xff] %v2040
          %2057 = vst [vmem:[#allocation2 + $0x70] sm:$0xff] %v2041
          %2058 = vst [vmem:[#allocation2 + $0x78] sm:$0xff] %v2042
        $region119: #{tpu_custom_call.1} parent=63 // pred_fallthru
          _
        %p2059 = scmp.eq.s32.totalorder %s30, 1
        %p2060 = pnand %p2059, %p550
        %p2061 = pneg %p2060
        // Predicated region
        $region120: #{tpu_custom_call.1} parent=63 // pred_check
          _
        $region121: #{tpu_custom_call.1} parent=63 // pred_check_branch
          %2063 = sbr.rel (%p2060) target = $region123
        $region122: #{tpu_custom_call.1} parent=63 // pred_region
          %v2064 = vld [vmem:[#allocation2] sm:$0xff]
          %v2065 = vld [vmem:[#allocation2 + $0x8] sm:$0xff]
          %v2066 = vld [vmem:[#allocation2 + $0x10] sm:$0xff]
          %v2067 = vld [vmem:[#allocation2 + $0x18] sm:$0xff]
          %v2068 = vld [vmem:[#allocation2 + $0x20] sm:$0xff]
          %v2069 = vld [vmem:[#allocation2 + $0x28] sm:$0xff]
          %v2070 = vld [vmem:[#allocation2 + $0x30] sm:$0xff]
          %v2071 = vld [vmem:[#allocation2 + $0x38] sm:$0xff]
          %v2072 = vld [vmem:[#allocation2 + $0x40] sm:$0xff]
          %v2073 = vld [vmem:[#allocation2 + $0x48] sm:$0xff]
          %v2074 = vld [vmem:[#allocation2 + $0x50] sm:$0xff]
          %v2075 = vld [vmem:[#allocation2 + $0x58] sm:$0xff]
          %v2076 = vld [vmem:[#allocation2 + $0x60] sm:$0xff]
          %v2077 = vld [vmem:[#allocation2 + $0x68] sm:$0xff]
          %v2078 = vld [vmem:[#allocation2 + $0x70] sm:$0xff]
          %v2079 = vld [vmem:[#allocation2 + $0x78] sm:$0xff]
          %v2080 = vpack.c.bf16 %v2065, %v2064
          %v2081 = vpack.c.bf16 %v2067, %v2066
          %v2082 = vpack.c.bf16 %v2069, %v2068
          %v2083 = vpack.c.bf16 %v2071, %v2070
          %v2084 = vpack.c.bf16 %v2073, %v2072
          %v2085 = vpack.c.bf16 %v2075, %v2074
          %v2086 = vpack.c.bf16 %v2077, %v2076
          %v2087 = vpack.c.bf16 %v2079, %v2078
          %v2088 = vld [vmem:[#allocation12] sm:$0xf]
          %v2089 = vld [vmem:[#allocation12 + $0x4] sm:$0xf]
          %v2090 = vld [vmem:[#allocation12 + $0x8] sm:$0xf]
          %v2091 = vld [vmem:[#allocation12 + $0xc] sm:$0xf]
          %v2092 = vld [vmem:[#allocation12 + $0x10] sm:$0xf]
          %v2093 = vld [vmem:[#allocation12 + $0x14] sm:$0xf]
          %v2094 = vld [vmem:[#allocation12 + $0x18] sm:$0xf]
          %v2095 = vld [vmem:[#allocation12 + $0x1c] sm:$0xf]
          %v2096 = vld [vmem:[#allocation12 + $0x20] sm:$0xf]
          %v2097 = vld [vmem:[#allocation12 + $0x24] sm:$0xf]
          %v2098 = vld [vmem:[#allocation12 + $0x28] sm:$0xf]
          %v2099 = vld [vmem:[#allocation12 + $0x2c] sm:$0xf]
          %v2100 = vld [vmem:[#allocation12 + $0x30] sm:$0xf]
          %v2101 = vld [vmem:[#allocation12 + $0x34] sm:$0xf]
          %v2102 = vld [vmem:[#allocation12 + $0x38] sm:$0xf]
          %v2103 = vld [vmem:[#allocation12 + $0x3c] sm:$0xf]
          %v2104 = vld [vmem:[%s11] sm:$0x1]
          %v2106 = vperm.slane %v2104, 0
          %v2124 = vunpack.c.l.b16 %v2088
          %v2125 = vunpack.c.l.b16 %v2089
          %v2126 = vunpack.c.l.b16 %v2090
          %v2127 = vunpack.c.l.b16 %v2091
          %v2128 = vunpack.c.l.b16 %v2092
          %v2129 = vunpack.c.l.b16 %v2093
          %v2130 = vunpack.c.l.b16 %v2094
          %v2131 = vunpack.c.l.b16 %v2095
          %v2132 = vunpack.c.l.b16 %v2096
          %v2133 = vunpack.c.l.b16 %v2097
          %v2134 = vunpack.c.l.b16 %v2098
          %v2135 = vunpack.c.l.b16 %v2099
          %v2136 = vunpack.c.l.b16 %v2100
          %v2137 = vunpack.c.l.b16 %v2101
          %v2138 = vunpack.c.l.b16 %v2102
          %v2139 = vunpack.c.l.b16 %v2103
          %v2140 = vpack.c.b16 %v2125, %v2124
          %v2141 = vpack.c.b16 %v2127, %v2126
          %v2142 = vpack.c.b16 %v2129, %v2128
          %v2143 = vpack.c.b16 %v2131, %v2130
          %v2144 = vpack.c.b16 %v2133, %v2132
          %v2145 = vpack.c.b16 %v2135, %v2134
          %v2146 = vpack.c.b16 %v2137, %v2136
          %v2147 = vpack.c.b16 %v2139, %v2138
          %2156 = vmatpush.bf16.msra.mxu0 %v2147
          %2157 = vmatpush.bf16.msra.mxu0 %v2146
          %2158 = vmatpush.bf16.msra.mxu0 %v2145
          %2159 = vmatpush.bf16.msra.mxu0 %v2144
          %2160 = vmatpush.bf16.msra.mxu0 %v2143
          %2161 = vmatpush.bf16.msra.mxu0 %v2142
          %2162 = vmatpush.bf16.msra.mxu0 %v2141
          %2163 = vmatpush.bf16.msra.mxu0 %v2140
          %2164 = vmatmul.bf16.gmra.mxu0 %v2080
          %v2165 = vpop.f32.mrf.mxu0
          %v2166 = vadd.f32 %v2106, %v2165
          %v2167 = vpop.f32.mrf.mxu0
          %v2168 = vadd.f32 %v2106, %v2167
          %2169 = vmatmul.bf16.gmra.mxu0 %v2081
          %v2170 = vpop.f32.mrf.mxu0
          %v2171 = vadd.f32 %v2106, %v2170
          %v2172 = vpop.f32.mrf.mxu0
          %v2173 = vadd.f32 %v2106, %v2172
          %2174 = vmatmul.bf16.gmra.mxu0 %v2082
          %v2175 = vpop.f32.mrf.mxu0
          %v2176 = vadd.f32 %v2106, %v2175
          %v2177 = vpop.f32.mrf.mxu0
          %v2178 = vadd.f32 %v2106, %v2177
          %2179 = vmatmul.bf16.gmra.mxu0 %v2083
          %v2180 = vpop.f32.mrf.mxu0
          %v2181 = vadd.f32 %v2106, %v2180
          %v2182 = vpop.f32.mrf.mxu0
          %v2183 = vadd.f32 %v2106, %v2182
          %2184 = vmatmul.bf16.gmra.mxu0 %v2084
          %v2185 = vpop.f32.mrf.mxu0
          %v2186 = vadd.f32 %v2106, %v2185
          %v2187 = vpop.f32.mrf.mxu0
          %v2188 = vadd.f32 %v2106, %v2187
          %2189 = vmatmul.bf16.gmra.mxu0 %v2085
          %v2190 = vpop.f32.mrf.mxu0
          %v2191 = vadd.f32 %v2106, %v2190
          %v2192 = vpop.f32.mrf.mxu0
          %v2193 = vadd.f32 %v2106, %v2192
          %2194 = vmatmul.bf16.gmra.mxu0 %v2086
          %v2195 = vpop.f32.mrf.mxu0
          %v2196 = vadd.f32 %v2106, %v2195
          %v2197 = vpop.f32.mrf.mxu0
          %v2198 = vadd.f32 %v2106, %v2197
          %2199 = vmatmul.bf16.gmra.mxu0 %v2087
          %v2200 = vpop.f32.mrf.mxu0
          %v2201 = vadd.f32 %v2106, %v2200
          %v2202 = vpop.f32.mrf.mxu0
          %v2203 = vadd.f32 %v2106, %v2202
          %2204 = vdwg.mxu0
          %2205 = vst [vmem:[#allocation13] sm:$0xff] %v2166
          %2206 = vst [vmem:[#allocation13 + $0x8] sm:$0xff] %v2168
          %2207 = vst [vmem:[#allocation13 + $0x10] sm:$0xff] %v2171
          %2208 = vst [vmem:[#allocation13 + $0x18] sm:$0xff] %v2173
          %2209 = vst [vmem:[#allocation13 + $0x20] sm:$0xff] %v2176
          %2210 = vst [vmem:[#allocation13 + $0x28] sm:$0xff] %v2178
          %2211 = vst [vmem:[#allocation13 + $0x30] sm:$0xff] %v2181
          %2212 = vst [vmem:[#allocation13 + $0x38] sm:$0xff] %v2183
          %2213 = vst [vmem:[#allocation13 + $0x40] sm:$0xff] %v2186
          %2214 = vst [vmem:[#allocation13 + $0x48] sm:$0xff] %v2188
          %2215 = vst [vmem:[#allocation13 + $0x50] sm:$0xff] %v2191
          %2216 = vst [vmem:[#allocation13 + $0x58] sm:$0xff] %v2193
          %2217 = vst [vmem:[#allocation13 + $0x60] sm:$0xff] %v2196
          %2218 = vst [vmem:[#allocation13 + $0x68] sm:$0xff] %v2198
          %2219 = vst [vmem:[#allocation13 + $0x70] sm:$0xff] %v2201
          %2220 = vst [vmem:[#allocation13 + $0x78] sm:$0xff] %v2203
        $region123: #{tpu_custom_call.1} parent=63 // pred_fallthru
          _
        // Predicated region
        $region124: #{tpu_custom_call.1} parent=63 // pred_check
          %p2221 = pneg %p314
        $region125: #{tpu_custom_call.1} parent=63 // pred_check_branch
          %2223 = sbr.rel (%p2221) target = $region127
        $region126: #{tpu_custom_call.1} parent=63 // pred_region
          %2225 = vsyncadd [#allocation8], 0
          %s2226 = sshll.u32 [#allocation13], 4
          %s2227 = int_to_ptr.vmem [resolvable:$true] %s2226
          %s2228 = sshll.u32 %s12, 4
          %s2229 = int_to_ptr.hbm [resolvable:$true] %s2228
          %2234 = dma.vmem_to_hbm [thread:$0]  %s2227, 2048, %s2229, [#allocation8], 128, 128, 8
        $region127: #{tpu_custom_call.1} parent=63 // pred_fallthru
          _
        // Predicated region
        $region128: #{tpu_custom_call.1} parent=63 // pred_check
          %p2235 = pneg %p314
        $region129: #{tpu_custom_call.1} parent=63 // pred_check_branch
          %2237 = sbr.rel (%p2235) target = $region131
        $region130: #{tpu_custom_call.1} parent=63 // pred_region
          %2239 = dma.done [#allocation8], 2048
        $region131: #{tpu_custom_call.1} parent=63 // pred_fallthru
          _
      $region64: #{tpu_custom_call.1} parent=5 // pred_fallthru
        _
      %p2240 = scmp.le.s32.totalorder 2, %s21
      // Predicated region
      $region132: #{tpu_custom_call.1} parent=5 // pred_check
        %p2241 = pneg %p2240
      $region133: #{tpu_custom_call.1} parent=5 // pred_check_branch
        %2243 = sbr.rel (%p2241) target = $region135
      $region134: #{tpu_custom_call.1} parent=5 // pred_region
        %s2244 = ssub.s32 %s21, 2
      $region135: #{tpu_custom_call.1} parent=5 // pred_fallthru
        _
    $region6: #{tpu_custom_call.1} parent=1 // loop_footer
      %s25 = sadd.s32 1, %s21
    $region7: #{tpu_custom_call.1} parent=1 // loop_footer_branch
      %20 = sbr.rel target = $region3
    $region8: #{tpu_custom_call.1} parent=1 // loop_exit
      _
    %2245 = vsyncpa [#allocation7], 1
    %s2246 = scalar_lea.sflag [#allocation7], 1
    %2247 = vsyncpa %s2246, 1
    %2248 = vsyncpa [#allocation10], 1
    %2249 = vsyncpa [#allocation8], 1
    %s2250 = scalar_lea.sflag [#allocation8], 1
    %2251 = vsyncpa %s2250, 1
  %2252 = vsyncmov [#allocation5]
  %s2253 = vpop.sfrf %2252
  %p2254 = scmp.eq.s32.totalorder %s2253, 0
  %p2255 = pneg %p2254
  %2257 = shalt.err (%p2255)

</llo_original>
